<compile_context>
chip_gen: v6e
topology: v6e:2x2x1
jax: 0.10.0
libtpu: 0.0.40
codegen_flags: <defaults>
</compile_context>

<pallas_src>
import jax
import jax.numpy as jnp
from jax import lax
from jax.experimental import pallas as pl
from jax.experimental.pallas import tpu as pltpu

LANE = 128               # lane width: channel dims are lane-dense at kernel boundaries
TILE_M_L1 = 8192         # layer-1 im2col row-tile target (K tiny -> tile can be huge)
ROW_TILE_TARGET = 4096   # fused layers: target output rows (tr*Wo) per grid step


def _round_up(x, m):
    return (x + m - 1) // m * m


def _default_vmem_limit():
    """Per-generation scoped-VMEM budget: ~3/4 of physical VMEM, capped at 96 MiB
       (~48 MiB on v7x with 64 MiB physical; 96 MiB on v5e/v6e with 128 MiB)."""
    try:
        cap = getattr(pltpu.get_tpu_info(), "vmem_capacity_bytes", 64 * 1024 * 1024)
    except Exception:
        cap = 64 * 1024 * 1024
    return int(min(96 * 1024 * 1024, max(32 * 1024 * 1024, cap * 3 // 4)))


VMEM_LIMIT = _default_vmem_limit()


# ----------------------------- Pallas kernels -----------------------------

def conv_gdn_kernel(p_ref, w_ref, b_ref, g_ref, beta_ref, o_ref):
    """Layer 1: streamed im2col matmul + bias + GDN for one [TM, Cpad] row tile.

    p_ref:    [TM, K]     bf16 im2col patches (tiled along the grid)
    w_ref:    [K,  Cp]    bf16 conv weight            (resident across grid)
    b_ref:    [1,  Cp]    f32  bias                   (resident)
    g_ref:    [Cp, Cp]    bf16 gamma^T                (resident, bf16 MXU operand)
    beta_ref: [1,  Cp]    f32  GDN beta               (resident)
    o_ref:    [TM, Cp]    bf16 output tile (Cp multiple of 128 -> lane-dense stores)
    """
    y = jnp.dot(p_ref[...], w_ref[...], preferred_element_type=jnp.float32) + b_ref[...]
    # GDN: y * rsqrt(beta + gamma @ y^2); bf16 MXU operands, f32 accumulation + rsqrt.
    z = jnp.dot((y * y).astype(jnp.bfloat16), g_ref[...],
                preferred_element_type=jnp.float32) + beta_ref[...]
    o_ref[...] = (y * lax.rsqrt(z)).astype(o_ref.dtype)


def fused_conv_gdn_kernel(x_ref, w_ref, b_ref, g_ref, beta_ref, o_ref):
    """Fused-im2col 3x3 conv (stride 1) + bias + GDN for a block of output rows.

    x_ref:    [1, Ho+2, Wo, 3C] bf16 kw-folded activation, one whole image resident
    w_ref:    [3, 3C, Cp]       bf16 per-kh matmul weights (resident)
    b_ref:    [1, Cp]           f32  bias (resident)
    g_ref:    [Cp, Cp]          bf16 gamma^T (resident)
    beta_ref: [1, Cp]           f32  GDN beta (resident)
    o_ref:    [1, TR, Wo, Cp]   bf16 output row-block (lane-dense)
    """
    _, tr, wo, cout = o_ref.shape
    kc = x_ref.shape[3]
    r0 = pl.program_id(1) * tr
    acc = None
    for kh in range(3):   # unrolled: 3 kh-shifted in-VMEM matmuls (fused im2col)
        lhs = x_ref[0, pl.ds(r0 + kh, tr), :, :].reshape(tr * wo, kc)
        part = jnp.dot(lhs, w_ref[kh], preferred_element_type=jnp.float32)
        acc = part if acc is None else acc + part
    y = acc + b_ref[...]
    z = jnp.dot((y * y).astype(jnp.bfloat16), g_ref[...],
                preferred_element_type=jnp.float32) + beta_ref[...]
    o_ref[...] = (y * lax.rsqrt(z)).astype(o_ref.dtype).reshape(o_ref.shape)


def fused_conv_kernel(x_ref, w_ref, b_ref, o_ref):
    """Fused-im2col 3x3 conv (stride 1) + bias, no GDN (last layer)."""
    _, tr, wo, cout = o_ref.shape
    kc = x_ref.shape[3]
    r0 = pl.program_id(1) * tr
    acc = None
    for kh in range(3):
        lhs = x_ref[0, pl.ds(r0 + kh, tr), :, :].reshape(tr * wo, kc)
        part = jnp.dot(lhs, w_ref[kh], preferred_element_type=jnp.float32)
        acc = part if acc is None else acc + part
    y = acc + b_ref[...]
    o_ref[...] = y.astype(o_ref.dtype).reshape(o_ref.shape)


# ----------------------------- tile-size helpers -----------------------------

def _pick_tile_m(m, target):
    """Row-tile for the layer-1 im2col matmul: multiple of 16 (bf16 (16,128) tile),
       >=2 grid steps when possible, prefer a divisor of m (no padding copy)."""
    if m <= 16:
        return _round_up(m, 8)
    cap = min(target, m // 2)                 # >=2 grid steps (v7x megacore)
    cap = max(16, (cap // 16) * 16)
    for tm in range(cap, 15, -16):            # prefer no ragged/padded last block
        if m % tm == 0:
            return tm
    return cap


def _pick_tile_rows(n, ho, wo, target_rows=ROW_TILE_TARGET):
    """Output-row block for the fused layers: a divisor of Ho with tr*Wo <= target,
       shrunk if needed so the grid has >=2 steps (both v7x TensorCores busy)."""
    divs = [d for d in range(1, ho + 1) if ho % d == 0]
    cands = [d for d in divs if d * wo <= max(target_rows, wo)] or [1]
    tr = max(cands)
    if n * (ho // tr) < 2:
        smaller = [d for d in cands if d < tr]
        if smaller:
            tr = max(smaller)
    return tr


# ----------------------------- pallas_call wrappers -----------------------------

def _tiled_call(kernel, patches, resident, cout, out_dtype, tile_target):
    """Layer-1 path: [M, K] patches tiled along M; resident operands pinned in VMEM."""
    m, k = patches.shape
    tm = _pick_tile_m(m, tile_target)
    m_pad = _round_up(m, tm)
    if m_pad != m:
        # Padded rows stay finite (y = bias, z = beta + (..) >= beta > 0); sliced off.
        patches = jnp.pad(patches, ((0, m_pad - m), (0, 0)))

    in_specs = [pl.BlockSpec((tm, k), lambda i: (i, 0))]
    in_specs += [pl.BlockSpec(r.shape, lambda i, nd=r.ndim: (0,) * nd) for r in resident]

    out = pl.pallas_call(
        kernel,
        grid=(m_pad // tm,),
        in_specs=in_specs,
        out_specs=pl.BlockSpec((tm, cout), lambda i: (i, 0)),
        out_shape=jax.ShapeDtypeStruct((m_pad, cout), out_dtype),
        compiler_params=pltpu.CompilerParams(
            dimension_semantics=("parallel",),
            vmem_limit_bytes=VMEM_LIMIT,
        ),
    )(patches, *resident)
    return out[:m] if m_pad != m else out


def _fused_conv_call(kernel, xkw, resident, cout, out_dtype, n, ho, wo):
    """Fused layers: grid over (batch, output-row blocks); the kw-folded image is
       resident in VMEM per batch index (block index does not change with the row axis,
       so Pallas fetches it once per image)."""
    tr = _pick_tile_rows(n, ho, wo)
    hp, kc = xkw.shape[1], xkw.shape[3]

    in_specs = [pl.BlockSpec((1, hp, wo, kc), lambda i, r: (i, 0, 0, 0))]
    in_specs += [pl.BlockSpec(w.shape, lambda i, r, nd=w.ndim: (0,) * nd) for w in resident]

    return pl.pallas_call(
        kernel,
        grid=(n, ho // tr),
        in_specs=in_specs,
        out_specs=pl.BlockSpec((1, tr, wo, cout), lambda i, r: (i, r, 0, 0)),
        out_shape=jax.ShapeDtypeStruct((n, ho, wo, cout), out_dtype),
        compiler_params=pltpu.CompilerParams(
            dimension_semantics=("parallel", "parallel"),
            vmem_limit_bytes=VMEM_LIMIT,
        ),
    )(xkw, *resident)


# ----------------------------- XLA glue (layout only, no heavy math) -----------------------------

def _im2col_l1(x_nhwc, k_pad):
    """3x3 / stride-2 / zero-pad-1 im2col for the tiny 2-channel first layer.
       Returns [N*Ho*Wo, k_pad], patch order (kh, kw, c); the K pad columns are part of
       the same concat (no separate full-array pad pass)."""
    n, h, w, c = x_nhwc.shape
    s = 2
    xp = jnp.pad(x_nhwc, ((0, 0), (1, 1), (1, 1), (0, 0)))
    ho = (h + 2 - 3) // s + 1
    wo = (w + 2 - 3) // s + 1
    cols = []
    for kh in range(3):
        for kw in range(3):
            cols.append(lax.slice(
                xp, (0, kh, kw, 0),
                (n, kh + (ho - 1) * s + 1, kw + (wo - 1) * s + 1, c),
                (1, s, s, 1)))
    k = 9 * c
    if k_pad > k:
        cols.append(jnp.zeros((n, ho, wo, k_pad - k), x_nhwc.dtype))
    patches = jnp.concatenate(cols, axis=-1)
    return patches.reshape(n * ho * wo, k_pad), (n, ho, wo)


def _kw_concat(x_nhwc):
    """Fold the kw (width) taps of a 3x3 / pad-1 / stride-1 conv into channels:
       out[n, h, w, kw*C + c] = x_pad[n, h, w + kw, c].  Height keeps the +-1 pad
       (kh is handled in-kernel); width is the output width."""
    n, h, wd, c = x_nhwc.shape
    xp = jnp.pad(x_nhwc, ((0, 0), (1, 1), (1, 1), (0, 0)))
    cols = [xp[:, :, kw:kw + wd, :] for kw in range(3)]
    return jnp.concatenate(cols, axis=-1)          # [N, H+2, W, 3C]


# ----------------------------- one-time parameter preparation -----------------------------

def prepare_params(params, in_channels=2):
    """Pad / transpose / reshape weights ONCE (not per forward call):
       * layer-1 conv -> [Kpad, Cpad] bf16 (im2col layout, K padded to a sublane multiple),
       * layers 2-4   -> [3, 3*C, Cpad] bf16 per-kh matmul weights matching _kw_concat order,
       * output channels padded to a multiple of 128 (lane-dense stores),
       * gamma -> padded gamma^T in bf16, beta padded with ones (keeps rsqrt finite)."""
    c = params["g1"].shape[0]                      # num_filter
    lc = params["w4"].shape[0]                     # last_channel
    cpad = _round_up(c, LANE)
    lpad = _round_up(lc, LANE)

    def prep_conv_l1(w, b, cout_pad):
        cout, cin = w.shape[0], w.shape[1]
        wt = jnp.transpose(w, (2, 3, 1, 0))        # [kh, kw, cin, cout]
        k = 9 * cin
        kpad = _round_up(k, 32)
        w_mat = jnp.zeros((kpad, cout_pad), jnp.float32)
        w_mat = w_mat.at[:k, :cout].set(wt.reshape(k, cout))
        b_pad = jnp.zeros((1, cout_pad), jnp.float32).at[0, :cout].set(b)
        return w_mat.astype(jnp.bfloat16), b_pad

    def prep_conv_fused(w, b, c_real, cout_pad):
        cout, cin = w.shape[0], w.shape[1]
        wt = jnp.transpose(w, (2, 3, 1, 0))        # [kh, kw, cin, cout]
        w_e = jnp.zeros((3, 3, c_real, cout_pad), jnp.float32)
        w_e = w_e.at[:, :, :cin, :cout].set(wt)
        w_mat = w_e.reshape(3, 3 * c_real, cout_pad)    # row index = kw*C + cin
        b_pad = jnp.zeros((1, cout_pad), jnp.float32).at[0, :cout].set(b)
        return w_mat.astype(jnp.bfloat16), b_pad

    def prep_gdn(gamma, beta):
        g = jnp.zeros((cpad, cpad), jnp.float32).at[:c, :c].set(gamma)
        g_t = jnp.transpose(g).astype(jnp.bfloat16)     # bf16 MXU operand (f32 accum)
        beta_pad = jnp.ones((1, cpad), jnp.float32).at[0, :c].set(beta)
        return g_t, beta_pad

    prep = {}
    prep["w1"], prep["b1"] = prep_conv_l1(params["w1"], params["b1"], cpad)
    prep["w2"], prep["b2"] = prep_conv_fused(params["w2"], params["b2"], c, cpad)
    prep["w3"], prep["b3"] = prep_conv_fused(params["w3"], params["b3"], c, cpad)
    prep["w4"], prep["b4"] = prep_conv_fused(params["w4"], params["b4"], c, lpad)
    for i in (1, 2, 3):
        prep[f"g{i}"], prep[f"beta{i}"] = prep_gdn(params[f"g{i}"], params[f"beta{i}"])
    return prep


# ----------------------------- forward pass -----------------------------

def balle2_encoder_forward(x_nchw, prep, num_filter, last_channel):
    cpad = prep["b1"].shape[1]
    lpad = prep["b4"].shape[1]

    # NCHW -> NHWC, bf16 activations (f32 accumulation inside the kernels).
    x = jnp.transpose(x_nchw, (0, 2, 3, 1)).astype(jnp.bfloat16)

    # ---- layer 1: conv(stride 2) + GDN, streamed im2col (Cin=2 -> K only 18->32)
    patches, (n, ho, wo) = _im2col_l1(x, k_pad=prep["w1"].shape[0])
    y = _tiled_call(conv_gdn_kernel, patches,
                    (prep["w1"], prep["b1"], prep["g1"], prep["beta1"]),
                    cout=cpad, out_dtype=jnp.bfloat16, tile_target=TILE_M_L1)
    x = y.reshape(n, ho, wo, cpad)

    # ---- layers 2, 3: fused-im2col conv(stride 1) + GDN
    # Slice back to the real channels before folding kw taps, so the lane padding is
    # never carried into the contraction (K = 3*num_filter, not 9*128).
    for i in (2, 3):
        xkw = _kw_concat(x[..., :num_filter])
        x = _fused_conv_call(fused_conv_gdn_kernel, xkw,
                             (prep[f"w{i}"], prep[f"b{i}"],
                              prep[f"g{i}"], prep[f"beta{i}"]),
                             cout=cpad, out_dtype=jnp.bfloat16, n=n, ho=ho, wo=wo)

    # ---- layer 4: fused-im2col conv(stride 1); bf16 output, slice/cast in the epilogue
    xkw = _kw_concat(x[..., :num_filter])
    y = _fused_conv_call(fused_conv_kernel, xkw, (prep["w4"], prep["b4"]),
                         cout=lpad, out_dtype=jnp.bfloat16, n=n, ho=ho, wo=wo)
    y = y[..., :last_channel].astype(jnp.float32)
    return jnp.transpose(y, (0, 3, 1, 2))              # NHWC -> NCHW


# ----------------------------- deterministic param init -----------------------------

def init_params(key, num_filter=32, last_channel=32):
    keys = jax.random.split(key, 8)

    def conv_w(k, cin, cout):
        return jax.random.normal(k, (cout, cin, 3, 3), jnp.float32) / jnp.sqrt(9.0 * cin)

    c, lc = num_filter, last_channel
    params = {
        "w1": conv_w(keys[0], 2, c),  "b1": 0.01 * jax.random.normal(keys[1], (c,), jnp.float32),
        "w2": conv_w(keys[2], c, c),  "b2": 0.01 * jax.random.normal(keys[3], (c,), jnp.float32),
        "w3": conv_w(keys[4], c, c),  "b3": 0.01 * jax.random.normal(keys[5], (c,), jnp.float32),
        "w4": conv_w(keys[6], c, lc), "b4": 0.01 * jax.random.normal(keys[7], (lc,), jnp.float32),
    }
    # GDN params (standard init: gamma ~ 0.1*I kept strictly positive, beta = 1)
    for i in (1, 2, 3):
        params[f"g{i}"] = 0.1 * jnp.eye(c, dtype=jnp.float32) + 1e-3
        params[f"beta{i}"] = jnp.ones((c,), jnp.float32)
    return params


# ----------------------------- plain-JAX reference -----------------------------

def reference_forward(x, params):
    def conv(x, w, b, stride):
        y = lax.conv_general_dilated(
            x, w, (stride, stride), ((1, 1), (1, 1)),
            dimension_numbers=("NCHW", "OIHW", "NCHW"))
        return y + b[None, :, None, None]

    def gdn(x, gamma, beta):
        z = jnp.einsum("ij,njhw->nihw", gamma, x * x) + beta[None, :, None, None]
        return x / jnp.sqrt(z)

    x = conv(x, params["w1"], params["b1"], 2)
    x = gdn(x, params["g1"], params["beta1"])
    x = conv(x, params["w2"], params["b2"], 1)
    x = gdn(x, params["g2"], params["beta2"])
    x = conv(x, params["w3"], params["b3"], 1)
    x = gdn(x, params["g3"], params["beta3"])
    x = conv(x, params["w4"], params["b4"], 1)
    return x


# ----------------------------- main -----------------------------

if __name__ == "__main__":
    key = jax.random.PRNGKey(0)
    kx, kp = jax.random.split(key)

    num_filter, last_channel = 32, 32
    x = jax.random.normal(kx, (2, 2, 16, 16), jnp.float32)   # NCHW, 2 input channels
    params = init_params(kp, num_filter=num_filter, last_channel=last_channel)
    prep = prepare_params(params)                            # one-time weight re-layout

    fwd = jax.jit(balle2_encoder_forward, static_argnames=("num_filter", "last_channel"))
    out = jax.block_until_ready(
        fwd(x, prep, num_filter=num_filter, last_channel=last_channel))

    assert out.shape == (2, last_channel, 8, 8), out.shape
    assert bool(jnp.isfinite(out).all())

    ref = reference_forward(x, params)
    rel_err = jnp.max(jnp.abs(out - ref)) / (jnp.max(jnp.abs(ref)) + 1e-6)
    assert float(rel_err) < 5e-2, float(rel_err)

    print("KERNEL_OK")
</pallas_src>

<mosaic_0001>
module attributes {stable_mosaic.version = 11 : i64} {
  func.func @conv_gdn_kernel(%arg0: i32, %arg1: memref<64x32xbf16, #tpu.memory_space<vmem>>, %arg2: memref<32x128xbf16, #tpu.memory_space<vmem>>, %arg3: memref<1x128xf32, #tpu.memory_space<vmem>>, %arg4: memref<128x128xbf16, #tpu.memory_space<vmem>>, %arg5: memref<1x128xf32, #tpu.memory_space<vmem>>, %arg6: memref<64x128xbf16, #tpu.memory_space<vmem>>) attributes {dimension_semantics = [#tpu.dimension_semantics<parallel>], iteration_bounds = array<i64: 2>, scalar_prefetch = 0 : i64, scratch_operands = 0 : i64, tpu.core_type = #tpu.core_type<tc>, window_params = [{transform_indices = @transform_0, window_bounds = array<i64: 64, 32>}, {pipeline_mode = #tpu.pipeline_mode<synchronous>, transform_indices = @transform_1, window_bounds = array<i64: 32, 128>}, {pipeline_mode = #tpu.pipeline_mode<synchronous>, transform_indices = @transform_2, window_bounds = array<i64: 1, 128>}, {pipeline_mode = #tpu.pipeline_mode<synchronous>, transform_indices = @transform_3, window_bounds = array<i64: 128, 128>}, {pipeline_mode = #tpu.pipeline_mode<synchronous>, transform_indices = @transform_4, window_bounds = array<i64: 1, 128>}, {transform_indices = @transform_5, window_bounds = array<i64: 64, 128>}]} {
    %c0 = arith.constant 0 : index
    %c0_0 = arith.constant 0 : index
    %0 = vector.load %arg1[%c0, %c0_0] : memref<64x32xbf16, #tpu.memory_space<vmem>>, vector<64x32xbf16>
    %c0_1 = arith.constant 0 : index
    %c0_2 = arith.constant 0 : index
    %1 = vector.load %arg2[%c0_1, %c0_2] : memref<32x128xbf16, #tpu.memory_space<vmem>>, vector<32x128xbf16>
    %cst = arith.constant dense<0.000000e+00> : vector<64x128xf32>
    %2 = tpu.matmul %0, %1, %cst {dimension_numbers = #tpu.dot_dimension_numbers<[1], [0], [0], [1], [0, 0, 1, 1], [], []>} : vector<64x32xbf16>, vector<32x128xbf16>, vector<64x128xf32> -> vector<64x128xf32>
    %c0_3 = arith.constant 0 : index
    %c0_4 = arith.constant 0 : index
    %3 = vector.load %arg3[%c0_3, %c0_4] : memref<1x128xf32, #tpu.memory_space<vmem>>, vector<1x128xf32>
    %4 = vector.broadcast %3 : vector<1x128xf32> to vector<64x128xf32>
    %5 = arith.addf %2, %4 : vector<64x128xf32>
    %6 = arith.mulf %5, %5 : vector<64x128xf32>
    %7 = arith.truncf %6 : vector<64x128xf32> to vector<64x128xbf16>
    %c0_5 = arith.constant 0 : index
    %c0_6 = arith.constant 0 : index
    %8 = vector.load %arg4[%c0_5, %c0_6] : memref<128x128xbf16, #tpu.memory_space<vmem>>, vector<128x128xbf16>
    %cst_7 = arith.constant dense<0.000000e+00> : vector<64x128xf32>
    %9 = tpu.matmul %7, %8, %cst_7 {dimension_numbers = #tpu.dot_dimension_numbers<[1], [0], [0], [1], [0, 0, 1, 1], [], []>} : vector<64x128xbf16>, vector<128x128xbf16>, vector<64x128xf32> -> vector<64x128xf32>
    %c0_8 = arith.constant 0 : index
    %c0_9 = arith.constant 0 : index
    %10 = vector.load %arg5[%c0_8, %c0_9] : memref<1x128xf32, #tpu.memory_space<vmem>>, vector<1x128xf32>
    %11 = vector.broadcast %10 : vector<1x128xf32> to vector<64x128xf32>
    %12 = arith.addf %9, %11 : vector<64x128xf32>
    %13 = math.rsqrt %12 : vector<64x128xf32>
    %14 = arith.mulf %5, %13 : vector<64x128xf32>
    %15 = arith.truncf %14 : vector<64x128xf32> to vector<64x128xbf16>
    %c0_10 = arith.constant 0 : index
    %c0_11 = arith.constant 0 : index
    %16 = vector.load %arg6[%c0_10, %c0_11] : memref<64x128xbf16, #tpu.memory_space<vmem>>, vector<64x128xbf16>
    tpu.vector_store %arg6[%c0_10, %c0_11], %15 {strides = array<i32>} : memref<64x128xbf16, #tpu.memory_space<vmem>>, vector<64x128xbf16>,
    return
  }
  func.func @transform_0(%arg0: i32) -> (i32, i32) {
    %c0_i32 = arith.constant 0 : i32
    %c0_i32_0 = arith.constant 0 : i32
    return %arg0, %c0_i32 : i32, i32
  }
  func.func @transform_1(%arg0: i32) -> (i32, i32) {
    %c0_i32 = arith.constant 0 : i32
    %c0_i32_0 = arith.constant 0 : i32
    %c0_i32_1 = arith.constant 0 : i32
    return %c0_i32, %c0_i32_0 : i32, i32
  }
  func.func @transform_2(%arg0: i32) -> (i32, i32) {
    %c0_i32 = arith.constant 0 : i32
    %c0_i32_0 = arith.constant 0 : i32
    %c0_i32_1 = arith.constant 0 : i32
    return %c0_i32, %c0_i32_0 : i32, i32
  }
  func.func @transform_3(%arg0: i32) -> (i32, i32) {
    %c0_i32 = arith.constant 0 : i32
    %c0_i32_0 = arith.constant 0 : i32
    %c0_i32_1 = arith.constant 0 : i32
    return %c0_i32, %c0_i32_0 : i32, i32
  }
  func.func @transform_4(%arg0: i32) -> (i32, i32) {
    %c0_i32 = arith.constant 0 : i32
    %c0_i32_0 = arith.constant 0 : i32
    %c0_i32_1 = arith.constant 0 : i32
    return %c0_i32, %c0_i32_0 : i32, i32
  }
  func.func @transform_5(%arg0: i32) -> (i32, i32) {
    %c0_i32 = arith.constant 0 : i32
    %c0_i32_0 = arith.constant 0 : i32
    return %arg0, %c0_i32 : i32, i32
  }
}

module attributes {stable_mosaic.version = 11 : i64} {
  func.func @fused_conv_gdn_kernel(%arg0: i32, %arg1: i32, %arg2: memref<1x10x8x96xbf16, #tpu.memory_space<vmem>>, %arg3: memref<3x96x128xbf16, #tpu.memory_space<vmem>>, %arg4: memref<1x128xf32, #tpu.memory_space<vmem>>, %arg5: memref<128x128xbf16, #tpu.memory_space<vmem>>, %arg6: memref<1x128xf32, #tpu.memory_space<vmem>>, %arg7: memref<1x8x8x128xbf16, #tpu.memory_space<vmem>>) attributes {dimension_semantics = [#tpu.dimension_semantics<parallel>, #tpu.dimension_semantics<parallel>], iteration_bounds = array<i64: 2, 1>, scalar_prefetch = 0 : i64, scratch_operands = 0 : i64, tpu.core_type = #tpu.core_type<tc>, window_params = [{transform_indices = @transform_0, window_bounds = array<i64: 1, 10, 8, 96>}, {pipeline_mode = #tpu.pipeline_mode<synchronous>, transform_indices = @transform_1, window_bounds = array<i64: 3, 96, 128>}, {pipeline_mode = #tpu.pipeline_mode<synchronous>, transform_indices = @transform_2, window_bounds = array<i64: 1, 128>}, {pipeline_mode = #tpu.pipeline_mode<synchronous>, transform_indices = @transform_3, window_bounds = array<i64: 128, 128>}, {pipeline_mode = #tpu.pipeline_mode<synchronous>, transform_indices = @transform_4, window_bounds = array<i64: 1, 128>}, {transform_indices = @transform_5, window_bounds = array<i64: 1, 8, 8, 128>}]} {
    %c8_i32 = arith.constant 8 : i32
    %0 = arith.muli %arg1, %c8_i32 : i32
    %c0_i32 = arith.constant 0 : i32
    %1 = arith.addi %0, %c0_i32 : i32
    %c0 = arith.constant 0 : index
    %2 = arith.index_cast %1 : i32 to index
    %c0_0 = arith.constant 0 : index
    %c0_1 = arith.constant 0 : index
    %3 = vector.load %arg2[%c0, %2, %c0_0, %c0_1] : memref<1x10x8x96xbf16, #tpu.memory_space<vmem>>, vector<1x8x8x96xbf16>
    %4 = vector.shape_cast %3 : vector<1x8x8x96xbf16> to vector<8x8x96xbf16>
    %5 = vector.shape_cast %4 : vector<8x8x96xbf16> to vector<64x96xbf16>
    %c0_2 = arith.constant 0 : index
    %c0_3 = arith.constant 0 : index
    %c0_4 = arith.constant 0 : index
    %6 = vector.load %arg3[%c0_2, %c0_3, %c0_4] : memref<3x96x128xbf16, #tpu.memory_space<vmem>>, vector<1x96x128xbf16>
    %7 = vector.shape_cast %6 : vector<1x96x128xbf16> to vector<96x128xbf16>
    %cst = arith.constant dense<0.000000e+00> : vector<64x128xf32>
    %8 = tpu.matmul %5, %7, %cst {dimension_numbers = #tpu.dot_dimension_numbers<[1], [0], [0], [1], [0, 0, 1, 1], [], []>} : vector<64x96xbf16>, vector<96x128xbf16>, vector<64x128xf32> -> vector<64x128xf32>
    %c1_i32 = arith.constant 1 : i32
    %9 = arith.addi %0, %c1_i32 : i32
    %c0_5 = arith.constant 0 : index
    %10 = arith.index_cast %9 : i32 to index
    %c0_6 = arith.constant 0 : index
    %c0_7 = arith.constant 0 : index
    %11 = vector.load %arg2[%c0_5, %10, %c0_6, %c0_7] : memref<1x10x8x96xbf16, #tpu.memory_space<vmem>>, vector<1x8x8x96xbf16>
    %12 = vector.shape_cast %11 : vector<1x8x8x96xbf16> to vector<8x8x96xbf16>
    %13 = vector.shape_cast %12 : vector<8x8x96xbf16> to vector<64x96xbf16>
    %c1 = arith.constant 1 : index
    %c0_8 = arith.constant 0 : index
    %c0_9 = arith.constant 0 : index
    %14 = vector.load %arg3[%c1, %c0_8, %c0_9] : memref<3x96x128xbf16, #tpu.memory_space<vmem>>, vector<1x96x128xbf16>
    %15 = vector.shape_cast %14 : vector<1x96x128xbf16> to vector<96x128xbf16>
    %cst_10 = arith.constant dense<0.000000e+00> : vector<64x128xf32>
    %16 = tpu.matmul %13, %15, %cst_10 {dimension_numbers = #tpu.dot_dimension_numbers<[1], [0], [0], [1], [0, 0, 1, 1], [], []>} : vector<64x96xbf16>, vector<96x128xbf16>, vector<64x128xf32> -> vector<64x128xf32>
    %17 = arith.addf %8, %16 : vector<64x128xf32>
    %c2_i32 = arith.constant 2 : i32
    %18 = arith.addi %0, %c2_i32 : i32
    %c0_11 = arith.constant 0 : index
    %19 = arith.index_cast %18 : i32 to index
    %c0_12 = arith.constant 0 : index
    %c0_13 = arith.constant 0 : index
    %20 = vector.load %arg2[%c0_11, %19, %c0_12, %c0_13] : memref<1x10x8x96xbf16, #tpu.memory_space<vmem>>, vector<1x8x8x96xbf16>
    %21 = vector.shape_cast %20 : vector<1x8x8x96xbf16> to vector<8x8x96xbf16>
    %22 = vector.shape_cast %21 : vector<8x8x96xbf16> to vector<64x96xbf16>
    %c2 = arith.constant 2 : index
    %c0_14 = arith.constant 0 : index
    %c0_15 = arith.constant 0 : index
    %23 = vector.load %arg3[%c2, %c0_14, %c0_15] : memref<3x96x128xbf16, #tpu.memory_space<vmem>>, vector<1x96x128xbf16>
    %24 = vector.shape_cast %23 : vector<1x96x128xbf16> to vector<96x128xbf16>
    %cst_16 = arith.constant dense<0.000000e+00> : vector<64x128xf32>
    %25 = tpu.matmul %22, %24, %cst_16 {dimension_numbers = #tpu.dot_dimension_numbers<[1], [0], [0], [1], [0, 0, 1, 1], [], []>} : vector<64x96xbf16>, vector<96x128xbf16>, vector<64x128xf32> -> vector<64x128xf32>
    %26 = arith.addf %17, %25 : vector<64x128xf32>
    %c0_17 = arith.constant 0 : index
    %c0_18 = arith.constant 0 : index
    %27 = vector.load %arg4[%c0_17, %c0_18] : memref<1x128xf32, #tpu.memory_space<vmem>>, vector<1x128xf32>
    %28 = vector.broadcast %27 : vector<1x128xf32> to vector<64x128xf32>
    %29 = arith.addf %26, %28 : vector<64x128xf32>
    %30 = arith.mulf %29, %29 : vector<64x128xf32>
    %31 = arith.truncf %30 : vector<64x128xf32> to vector<64x128xbf16>
    %c0_19 = arith.constant 0 : index
    %c0_20 = arith.constant 0 : index
    %32 = vector.load %arg5[%c0_19, %c0_20] : memref<128x128xbf16, #tpu.memory_space<vmem>>, vector<128x128xbf16>
    %cst_21 = arith.constant dense<0.000000e+00> : vector<64x128xf32>
    %33 = tpu.matmul %31, %32, %cst_21 {dimension_numbers = #tpu.dot_dimension_numbers<[1], [0], [0], [1], [0, 0, 1, 1], [], []>} : vector<64x128xbf16>, vector<128x128xbf16>, vector<64x128xf32> -> vector<64x128xf32>
    %c0_22 = arith.constant 0 : index
    %c0_23 = arith.constant 0 : index
    %34 = vector.load %arg6[%c0_22, %c0_23] : memref<1x128xf32, #tpu.memory_space<vmem>>, vector<1x128xf32>
    %35 = vector.broadcast %34 : vector<1x128xf32> to vector<64x128xf32>
    %36 = arith.addf %33, %35 : vector<64x128xf32>
    %37 = math.rsqrt %36 : vector<64x128xf32>
    %38 = arith.mulf %29, %37 : vector<64x128xf32>
    %39 = arith.truncf %38 : vector<64x128xf32> to vector<64x128xbf16>
    %40 = vector.shape_cast %39 : vector<64x128xbf16> to vector<1x8x8x128xbf16>
    %c0_24 = arith.constant 0 : index
    %c0_25 = arith.constant 0 : index
    %c0_26 = arith.constant 0 : index
    %c0_27 = arith.constant 0 : index
    %41 = vector.load %arg7[%c0_24, %c0_25, %c0_26, %c0_27] : memref<1x8x8x128xbf16, #tpu.memory_space<vmem>>, vector<1x8x8x128xbf16>
    tpu.vector_store %arg7[%c0_24, %c0_25, %c0_26, %c0_27], %40 {strides = array<i32>} : memref<1x8x8x128xbf16, #tpu.memory_space<vmem>>, vector<1x8x8x128xbf16>,
    return
  }
  func.func @transform_0(%arg0: i32, %arg1: i32) -> (i32, i32, i32, i32) {
    %c0_i32 = arith.constant 0 : i32
    %c0_i32_0 = arith.constant 0 : i32
    %c0_i32_1 = arith.constant 0 : i32
    %c0_i32_2 = arith.constant 0 : i32
    return %arg0, %c0_i32, %c0_i32_0, %c0_i32_1 : i32, i32, i32, i32
  }
  func.func @transform_1(%arg0: i32, %arg1: i32) -> (i32, i32, i32) {
    %c0_i32 = arith.constant 0 : i32
    %c0_i32_0 = arith.constant 0 : i32
    %c0_i32_1 = arith.constant 0 : i32
    %c0_i32_2 = arith.constant 0 : i32
    return %c0_i32, %c0_i32_0, %c0_i32_1 : i32, i32, i32
  }
  func.func @transform_2(%arg0: i32, %arg1: i32) -> (i32, i32) {
    %c0_i32 = arith.constant 0 : i32
    %c0_i32_0 = arith.constant 0 : i32
    %c0_i32_1 = arith.constant 0 : i32
    return %c0_i32, %c0_i32_0 : i32, i32
  }
  func.func @transform_3(%arg0: i32, %arg1: i32) -> (i32, i32) {
    %c0_i32 = arith.constant 0 : i32
    %c0_i32_0 = arith.constant 0 : i32
    %c0_i32_1 = arith.constant 0 : i32
    return %c0_i32, %c0_i32_0 : i32, i32
  }
  func.func @transform_4(%arg0: i32, %arg1: i32) -> (i32, i32) {
    %c0_i32 = arith.constant 0 : i32
    %c0_i32_0 = arith.constant 0 : i32
    %c0_i32_1 = arith.constant 0 : i32
    return %c0_i32, %c0_i32_0 : i32, i32
  }
  func.func @transform_5(%arg0: i32, %arg1: i32) -> (i32, i32, i32, i32) {
    %c0_i32 = arith.constant 0 : i32
    %c0_i32_0 = arith.constant 0 : i32
    %c0_i32_1 = arith.constant 0 : i32
    return %arg0, %arg1, %c0_i32, %c0_i32_0 : i32, i32, i32, i32
  }
}

module attributes {stable_mosaic.version = 11 : i64} {
  func.func @fused_conv_kernel(%arg0: i32, %arg1: i32, %arg2: memref<1x10x8x96xbf16, #tpu.memory_space<vmem>>, %arg3: memref<3x96x128xbf16, #tpu.memory_space<vmem>>, %arg4: memref<1x128xf32, #tpu.memory_space<vmem>>, %arg5: memref<1x8x8x128xbf16, #tpu.memory_space<vmem>>) attributes {dimension_semantics = [#tpu.dimension_semantics<parallel>, #tpu.dimension_semantics<parallel>], iteration_bounds = array<i64: 2, 1>, scalar_prefetch = 0 : i64, scratch_operands = 0 : i64, tpu.core_type = #tpu.core_type<tc>, window_params = [{transform_indices = @transform_0, window_bounds = array<i64: 1, 10, 8, 96>}, {pipeline_mode = #tpu.pipeline_mode<synchronous>, transform_indices = @transform_1, window_bounds = array<i64: 3, 96, 128>}, {pipeline_mode = #tpu.pipeline_mode<synchronous>, transform_indices = @transform_2, window_bounds = array<i64: 1, 128>}, {transform_indices = @transform_3, window_bounds = array<i64: 1, 8, 8, 128>}]} {
    %c8_i32 = arith.constant 8 : i32
    %0 = arith.muli %arg1, %c8_i32 : i32
    %c0_i32 = arith.constant 0 : i32
    %1 = arith.addi %0, %c0_i32 : i32
    %c0 = arith.constant 0 : index
    %2 = arith.index_cast %1 : i32 to index
    %c0_0 = arith.constant 0 : index
    %c0_1 = arith.constant 0 : index
    %3 = vector.load %arg2[%c0, %2, %c0_0, %c0_1] : memref<1x10x8x96xbf16, #tpu.memory_space<vmem>>, vector<1x8x8x96xbf16>
    %4 = vector.shape_cast %3 : vector<1x8x8x96xbf16> to vector<8x8x96xbf16>
    %5 = vector.shape_cast %4 : vector<8x8x96xbf16> to vector<64x96xbf16>
    %c0_2 = arith.constant 0 : index
    %c0_3 = arith.constant 0 : index
    %c0_4 = arith.constant 0 : index
    %6 = vector.load %arg3[%c0_2, %c0_3, %c0_4] : memref<3x96x128xbf16, #tpu.memory_space<vmem>>, vector<1x96x128xbf16>
    %7 = vector.shape_cast %6 : vector<1x96x128xbf16> to vector<96x128xbf16>
    %cst = arith.constant dense<0.000000e+00> : vector<64x128xf32>
    %8 = tpu.matmul %5, %7, %cst {dimension_numbers = #tpu.dot_dimension_numbers<[1], [0], [0], [1], [0, 0, 1, 1], [], []>} : vector<64x96xbf16>, vector<96x128xbf16>, vector<64x128xf32> -> vector<64x128xf32>
    %c1_i32 = arith.constant 1 : i32
    %9 = arith.addi %0, %c1_i32 : i32
    %c0_5 = arith.constant 0 : index
    %10 = arith.index_cast %9 : i32 to index
    %c0_6 = arith.constant 0 : index
    %c0_7 = arith.constant 0 : index
    %11 = vector.load %arg2[%c0_5, %10, %c0_6, %c0_7] : memref<1x10x8x96xbf16, #tpu.memory_space<vmem>>, vector<1x8x8x96xbf16>
    %12 = vector.shape_cast %11 : vector<1x8x8x96xbf16> to vector<8x8x96xbf16>
    %13 = vector.shape_cast %12 : vector<8x8x96xbf16> to vector<64x96xbf16>
    %c1 = arith.constant 1 : index
    %c0_8 = arith.constant 0 : index
    %c0_9 = arith.constant 0 : index
    %14 = vector.load %arg3[%c1, %c0_8, %c0_9] : memref<3x96x128xbf16, #tpu.memory_space<vmem>>, vector<1x96x128xbf16>
    %15 = vector.shape_cast %14 : vector<1x96x128xbf16> to vector<96x128xbf16>
    %cst_10 = arith.constant dense<0.000000e+00> : vector<64x128xf32>
    %16 = tpu.matmul %13, %15, %cst_10 {dimension_numbers = #tpu.dot_dimension_numbers<[1], [0], [0], [1], [0, 0, 1, 1], [], []>} : vector<64x96xbf16>, vector<96x128xbf16>, vector<64x128xf32> -> vector<64x128xf32>
    %17 = arith.addf %8, %16 : vector<64x128xf32>
    %c2_i32 = arith.constant 2 : i32
    %18 = arith.addi %0, %c2_i32 : i32
    %c0_11 = arith.constant 0 : index
    %19 = arith.index_cast %18 : i32 to index
    %c0_12 = arith.constant 0 : index
    %c0_13 = arith.constant 0 : index
    %20 = vector.load %arg2[%c0_11, %19, %c0_12, %c0_13] : memref<1x10x8x96xbf16, #tpu.memory_space<vmem>>, vector<1x8x8x96xbf16>
    %21 = vector.shape_cast %20 : vector<1x8x8x96xbf16> to vector<8x8x96xbf16>
    %22 = vector.shape_cast %21 : vector<8x8x96xbf16> to vector<64x96xbf16>
    %c2 = arith.constant 2 : index
    %c0_14 = arith.constant 0 : index
    %c0_15 = arith.constant 0 : index
    %23 = vector.load %arg3[%c2, %c0_14, %c0_15] : memref<3x96x128xbf16, #tpu.memory_space<vmem>>, vector<1x96x128xbf16>
    %24 = vector.shape_cast %23 : vector<1x96x128xbf16> to vector<96x128xbf16>
    %cst_16 = arith.constant dense<0.000000e+00> : vector<64x128xf32>
    %25 = tpu.matmul %22, %24, %cst_16 {dimension_numbers = #tpu.dot_dimension_numbers<[1], [0], [0], [1], [0, 0, 1, 1], [], []>} : vector<64x96xbf16>, vector<96x128xbf16>, vector<64x128xf32> -> vector<64x128xf32>
    %26 = arith.addf %17, %25 : vector<64x128xf32>
    %c0_17 = arith.constant 0 : index
    %c0_18 = arith.constant 0 : index
    %27 = vector.load %arg4[%c0_17, %c0_18] : memref<1x128xf32, #tpu.memory_space<vmem>>, vector<1x128xf32>
    %28 = vector.broadcast %27 : vector<1x128xf32> to vector<64x128xf32>
    %29 = arith.addf %26, %28 : vector<64x128xf32>
    %30 = arith.truncf %29 : vector<64x128xf32> to vector<64x128xbf16>
    %31 = vector.shape_cast %30 : vector<64x128xbf16> to vector<1x8x8x128xbf16>
    %c0_19 = arith.constant 0 : index
    %c0_20 = arith.constant 0 : index
    %c0_21 = arith.constant 0 : index
    %c0_22 = arith.constant 0 : index
    %32 = vector.load %arg5[%c0_19, %c0_20, %c0_21, %c0_22] : memref<1x8x8x128xbf16, #tpu.memory_space<vmem>>, vector<1x8x8x128xbf16>
    tpu.vector_store %arg5[%c0_19, %c0_20, %c0_21, %c0_22], %31 {strides = array<i32>} : memref<1x8x8x128xbf16, #tpu.memory_space<vmem>>, vector<1x8x8x128xbf16>,
    return
  }
  func.func @transform_0(%arg0: i32, %arg1: i32) -> (i32, i32, i32, i32) {
    %c0_i32 = arith.constant 0 : i32
    %c0_i32_0 = arith.constant 0 : i32
    %c0_i32_1 = arith.constant 0 : i32
    %c0_i32_2 = arith.constant 0 : i32
    return %arg0, %c0_i32, %c0_i32_0, %c0_i32_1 : i32, i32, i32, i32
  }
  func.func @transform_1(%arg0: i32, %arg1: i32) -> (i32, i32, i32) {
    %c0_i32 = arith.constant 0 : i32
    %c0_i32_0 = arith.constant 0 : i32
    %c0_i32_1 = arith.constant 0 : i32
    %c0_i32_2 = arith.constant 0 : i32
    return %c0_i32, %c0_i32_0, %c0_i32_1 : i32, i32, i32
  }
  func.func @transform_2(%arg0: i32, %arg1: i32) -> (i32, i32) {
    %c0_i32 = arith.constant 0 : i32
    %c0_i32_0 = arith.constant 0 : i32
    %c0_i32_1 = arith.constant 0 : i32
    return %c0_i32, %c0_i32_0 : i32, i32
  }
  func.func @transform_3(%arg0: i32, %arg1: i32) -> (i32, i32, i32, i32) {
    %c0_i32 = arith.constant 0 : i32
    %c0_i32_0 = arith.constant 0 : i32
    %c0_i32_1 = arith.constant 0 : i32
    return %arg0, %arg1, %c0_i32, %c0_i32_0 : i32, i32, i32, i32
  }
}

</mosaic_0001>

<llo_original>
// kernel: balle2_encoder_forward.4
$region0: #{balle2_encoder_forward.4}
  #allocation0 [shape = 'u32[]', space=smem, size = 0x4, offset = 0x4, fixed_abs, tag = 'smem constant byte address 0x4 - core index']
  #allocation1 [shape = 'u32[144,128]{1,0:T(1,128)}', space=vmem, size = 0x12000, scoped, tag = 'internal scratch']
  %s0 = inlined_call_operand.vmem [shape: bf16[128,32], index: 0, kind: input, shape index: {}]
  %s1 = inlined_call_operand.vmem [shape: bf16[32,128], index: 1, kind: input, shape index: {}]
  %s2 = inlined_call_operand.vmem [shape: f32[1,128], index: 2, kind: input, shape index: {}]
  %s3 = inlined_call_operand.vmem [shape: bf16[128,128], index: 3, kind: input, shape index: {}]
  %s4 = inlined_call_operand.vmem [shape: f32[1,128], index: 4, kind: input, shape index: {}]
  %s5 = inlined_call_operand.vmem [shape: bf16[128,128], index: 5, kind: output, shape index: {}]
  %s6 = sld [smem:[#allocation0]]
  $region53: #{balle2_encoder_forward.4} parent=0
    _
  %s8 = ssub.s32 1, %s6
  %s9 = scalar_select 0, %s8, %s6
  loop: start=0, step=1, limit=4
  $region2: #{balle2_encoder_forward.4} parent=0 // loop_pre_header
    _
  $region3: #{balle2_encoder_forward.4} parent=0 // loop_header
    %s11 = sphi 0, %s15
    %p12 = scmp.ge.s32.totalorder %s11, 4
    %s21 = sphi 0, %s23
    %s24 = sphi 0, %s21
    %s25 = sphi 0, %s24
    %s41 = sphi 0, %s25
    %s45 = sphi 0, %s45
    %s47 = sphi 0, %s45
    %s48 = sphi 0, %s47
    %s62 = sphi 0, %s48
    %s66 = sphi 0, %s66
    %s68 = sphi 0, %s66
    %s69 = sphi 0, %s68
    %s83 = sphi 0, %s69
    %s87 = sphi 0, %s87
    %s89 = sphi 0, %s87
    %s90 = sphi 0, %s89
    %s104 = sphi 0, %s90
    %s108 = sphi 0, %s108
    %s110 = sphi 0, %s108
    %s111 = sphi 0, %s110
    %s125 = sphi 0, %s111
    %s131 = sphi 0, %s133
    %s134 = sphi 0, %s131
    %s135 = sphi 0, %s134
    %s151 = sphi 0, %s135
  $region4: #{balle2_encoder_forward.4} parent=0 // loop_header_branch
    %14 = sbr.rel (%p12) target = $region8
  $region5: #{balle2_encoder_forward.4} parent=0 // loop_body
    %s16 = ssub.s32 %s11, 1
    %s17 = ssub.s32 %s11, 2
    %s18 = sadd.s32 %s11, 1
    %s19 = ssub.s32 %s11, %s18
    %p20 = scmp.eq.s32.totalorder %s19, 0
    %s22 = sadd.s32 %s21, 1
    %s23 = scalar_select %p20, %s21, %s22
    %p26 = pneg %p20
    %p27 = scmp.eq.s32.totalorder %s11, 1
    %p28 = por %p26, %p27
    %p29 = scmp.ne.s32.totalorder %s21, %s24
    %p30 = scmp.eq.s32.totalorder %s11, 0
    %p31 = por %p29, %p30
    %p32 = scmp.ne.s32.totalorder %s21, %s24
    %p33 = scmp.eq.s32.totalorder %s16, 1
    %p34 = por %p32, %p33
    %p35 = scmp.ne.s32.totalorder %s24, %s25
    %p36 = scmp.eq.s32.totalorder %s16, 0
    %p37 = por %p35, %p36
    %p38 = scmp.ne.s32.totalorder %s24, %s25
    %p39 = scmp.eq.s32.totalorder %s17, 1
    %p40 = por %p38, %p39
    %p42 = scmp.ne.s32.totalorder %s25, %s41
    %p43 = scmp.eq.s32.totalorder %s17, 0
    %p44 = por %p42, %p43
    %s46 = sadd.s32 %s45, 1
    %p49 = scmp.eq.s32.totalorder %s11, 1
    %p50 = scmp.ne.s32.totalorder %s45, %s47
    %p51 = scmp.eq.s32.totalorder %s11, 0
    %p52 = por %p50, %p51
    %p53 = scmp.ne.s32.totalorder %s45, %s47
    %p54 = scmp.eq.s32.totalorder %s16, 1
    %p55 = por %p53, %p54
    %p56 = scmp.ne.s32.totalorder %s47, %s48
    %p57 = scmp.eq.s32.totalorder %s16, 0
    %p58 = por %p56, %p57
    %p59 = scmp.ne.s32.totalorder %s47, %s48
    %p60 = scmp.eq.s32.totalorder %s17, 1
    %p61 = por %p59, %p60
    %p63 = scmp.ne.s32.totalorder %s48, %s62
    %p64 = scmp.eq.s32.totalorder %s17, 0
    %p65 = por %p63, %p64
    %s67 = sadd.s32 %s66, 1
    %p70 = scmp.eq.s32.totalorder %s11, 1
    %p71 = scmp.ne.s32.totalorder %s66, %s68
    %p72 = scmp.eq.s32.totalorder %s11, 0
    %p73 = por %p71, %p72
    %p74 = scmp.ne.s32.totalorder %s66, %s68
    %p75 = scmp.eq.s32.totalorder %s16, 1
    %p76 = por %p74, %p75
    %p77 = scmp.ne.s32.totalorder %s68, %s69
    %p78 = scmp.eq.s32.totalorder %s16, 0
    %p79 = por %p77, %p78
    %p80 = scmp.ne.s32.totalorder %s68, %s69
    %p81 = scmp.eq.s32.totalorder %s17, 1
    %p82 = por %p80, %p81
    %p84 = scmp.ne.s32.totalorder %s69, %s83
    %p85 = scmp.eq.s32.totalorder %s17, 0
    %p86 = por %p84, %p85
    %s88 = sadd.s32 %s87, 1
    %p91 = scmp.eq.s32.totalorder %s11, 1
    %p92 = scmp.ne.s32.totalorder %s87, %s89
    %p93 = scmp.eq.s32.totalorder %s11, 0
    %p94 = por %p92, %p93
    %p95 = scmp.ne.s32.totalorder %s87, %s89
    %p96 = scmp.eq.s32.totalorder %s16, 1
    %p97 = por %p95, %p96
    %p98 = scmp.ne.s32.totalorder %s89, %s90
    %p99 = scmp.eq.s32.totalorder %s16, 0
    %p100 = por %p98, %p99
    %p101 = scmp.ne.s32.totalorder %s89, %s90
    %p102 = scmp.eq.s32.totalorder %s17, 1
    %p103 = por %p101, %p102
    %p105 = scmp.ne.s32.totalorder %s90, %s104
    %p106 = scmp.eq.s32.totalorder %s17, 0
    %p107 = por %p105, %p106
    %s109 = sadd.s32 %s108, 1
    %p112 = scmp.eq.s32.totalorder %s11, 1
    %p113 = scmp.ne.s32.totalorder %s108, %s110
    %p114 = scmp.eq.s32.totalorder %s11, 0
    %p115 = por %p113, %p114
    %p116 = scmp.ne.s32.totalorder %s108, %s110
    %p117 = scmp.eq.s32.totalorder %s16, 1
    %p118 = por %p116, %p117
    %p119 = scmp.ne.s32.totalorder %s110, %s111
    %p120 = scmp.eq.s32.totalorder %s16, 0
    %p121 = por %p119, %p120
    %p122 = scmp.ne.s32.totalorder %s110, %s111
    %p123 = scmp.eq.s32.totalorder %s17, 1
    %p124 = por %p122, %p123
    %p126 = scmp.ne.s32.totalorder %s111, %s125
    %p127 = scmp.eq.s32.totalorder %s17, 0
    %p128 = por %p126, %p127
    %s129 = ssub.s32 %s11, %s18
    %p130 = scmp.eq.s32.totalorder %s129, 0
    %s132 = sadd.s32 %s131, 1
    %s133 = scalar_select %p130, %s131, %s132
    %p136 = pneg %p130
    %p137 = scmp.eq.s32.totalorder %s11, 1
    %p138 = por %p136, %p137
    %p139 = scmp.ne.s32.totalorder %s131, %s134
    %p140 = scmp.eq.s32.totalorder %s11, 0
    %p141 = por %p139, %p140
    %p142 = scmp.ne.s32.totalorder %s131, %s134
    %p143 = scmp.eq.s32.totalorder %s16, 1
    %p144 = por %p142, %p143
    %p145 = scmp.ne.s32.totalorder %s134, %s135
    %p146 = scmp.eq.s32.totalorder %s16, 0
    %p147 = por %p145, %p146
    %p148 = scmp.ne.s32.totalorder %s134, %s135
    %p149 = scmp.eq.s32.totalorder %s17, 1
    %p150 = por %p148, %p149
    %p152 = scmp.ne.s32.totalorder %s135, %s151
    %p153 = scmp.eq.s32.totalorder %s17, 0
    %p154 = por %p152, %p153
    %p155 = scmp.le.s32.totalorder 1, %s11
    %p156 = scmp.lt.s32.totalorder %s11, 3
    %p157 = pnand %p155, %p156
    %p158 = pneg %p157
    // Predicated region
    $region9: #{balle2_encoder_forward.4} parent=5 // pred_check
      _
    $region10: #{balle2_encoder_forward.4} parent=5 // pred_check_branch
      %160 = sbr.rel (%p157) target = $region12
    $region11: #{balle2_encoder_forward.4} parent=5 // pred_region
      %s161 = ssub.s32 %s11, 1
      // Predicated region
      $region13: #{balle2_encoder_forward.4} parent=11 // pred_check
        %p162 = pneg %p58
      $region14: #{balle2_encoder_forward.4} parent=11 // pred_check_branch
        %164 = sbr.rel (%p162) target = $region16
      $region15: #{balle2_encoder_forward.4} parent=11 // pred_region
        _
      $region16: #{balle2_encoder_forward.4} parent=11 // pred_fallthru
        _
      // Predicated region
      $region17: #{balle2_encoder_forward.4} parent=11 // pred_check
        %p165 = pneg %p79
      $region18: #{balle2_encoder_forward.4} parent=11 // pred_check_branch
        %167 = sbr.rel (%p165) target = $region20
      $region19: #{balle2_encoder_forward.4} parent=11 // pred_region
        _
      $region20: #{balle2_encoder_forward.4} parent=11 // pred_fallthru
        _
      // Predicated region
      $region21: #{balle2_encoder_forward.4} parent=11 // pred_check
        %p168 = pneg %p100
      $region22: #{balle2_encoder_forward.4} parent=11 // pred_check_branch
        %170 = sbr.rel (%p168) target = $region24
      $region23: #{balle2_encoder_forward.4} parent=11 // pred_region
        _
      $region24: #{balle2_encoder_forward.4} parent=11 // pred_fallthru
        _
      // Predicated region
      $region25: #{balle2_encoder_forward.4} parent=11 // pred_check
        %p171 = pneg %p121
      $region26: #{balle2_encoder_forward.4} parent=11 // pred_check_branch
        %173 = sbr.rel (%p171) target = $region28
      $region27: #{balle2_encoder_forward.4} parent=11 // pred_region
        _
      $region28: #{balle2_encoder_forward.4} parent=11 // pred_fallthru
        _
    $region12: #{balle2_encoder_forward.4} parent=5 // pred_fallthru
      _
    %p174 = scmp.lt.s32.totalorder %s11, 2
    // Predicated region
    $region29: #{balle2_encoder_forward.4} parent=5 // pred_check
      %p175 = pneg %p174
    $region30: #{balle2_encoder_forward.4} parent=5 // pred_check_branch
      %177 = sbr.rel (%p175) target = $region32
    $region31: #{balle2_encoder_forward.4} parent=5 // pred_region
      // Predicated region
      $region33: #{balle2_encoder_forward.4} parent=31 // pred_check
        %p178 = pneg %p31
      $region34: #{balle2_encoder_forward.4} parent=31 // pred_check_branch
        %180 = sbr.rel (%p178) target = $region36
      $region35: #{balle2_encoder_forward.4} parent=31 // pred_region
        %s181 = smul.u32 8, %s11
        %p182 = scmp.lt.s32.totalorder %s181, 15
        %s183 = scalar_select %p182, %s181, 15
        %s184 = smul.addr %s183, 4
        %s185 = scalar_lea.vmem %s0, %s184
        %s186 = smul.u32 8, %s11
      $region36: #{balle2_encoder_forward.4} parent=31 // pred_fallthru
        _
    $region32: #{balle2_encoder_forward.4} parent=5 // pred_fallthru
      _
    %p187 = scmp.le.s32.totalorder 1, %s11
    %p188 = scmp.lt.s32.totalorder %s11, 3
    %p189 = pnand %p187, %p188
    %p190 = pneg %p189
    // Predicated region
    $region37: #{balle2_encoder_forward.4} parent=5 // pred_check
      _
    $region38: #{balle2_encoder_forward.4} parent=5 // pred_check_branch
      %192 = sbr.rel (%p189) target = $region40
    $region39: #{balle2_encoder_forward.4} parent=5 // pred_region
      %s193 = ssub.s32 %s11, 1
      %s194 = smul.u32 8, %s16
      %p195 = scmp.lt.s32.totalorder %s194, 15
      %s196 = scalar_select %p195, %s194, 15
      %s197 = smul.addr %s196, 4
      %s198 = scalar_lea.vmem %s0, %s197
      %p199 = pneg %p37
      %p200 = pneg %p34
      %p201 = pneg %p58
      %p202 = pneg %p55
      %p203 = pneg %p79
      %p204 = pneg %p76
      %p205 = pneg %p100
      %p206 = pneg %p97
      %p207 = pneg %p121
      %p208 = pneg %p118
      %p209 = pneg %p147
      %p210 = pneg %p144
      %s211 = smul.u32 8, %s16
      %p212 = scmp.lt.s32.totalorder %s211, 15
      %s213 = scalar_select %p212, %s211, 15
      %s214 = smul.addr %s213, 4
      %s215 = scalar_lea.vmem %s5, %s214
      %s216 = smul.u32 8, %s16
      %p217 = scmp.lt.s32.totalorder %s216, 15
      %s218 = scalar_select %p217, %s216, 15
      %s219 = smul.addr %s218, 4
      %s220 = scalar_lea.vmem %s0, %s219
      %s221 = smul.u32 8, %s16
      %s222 = smul.u32 8, %s16
      %p223 = scmp.lt.s32.totalorder %s222, 15
      %s224 = scalar_select %p223, %s222, 15
      %s225 = smul.addr %s224, 4
      %s226 = scalar_lea.vmem %s5, %s225
      %s227 = smul.u32 8, %s16
      %v229 = vld [vmem:[%s220] sm:$0xf]
      %v230 = vld [vmem:[%s220 + $0x4] sm:$0xf]
      %v231 = vld [vmem:[%s220 + $0x8] sm:$0xf]
      %v232 = vld [vmem:[%s220 + $0xc] sm:$0xf]
      %v233 = vld [vmem:[%s220 + $0x10] sm:$0xf]
      %v234 = vld [vmem:[%s220 + $0x14] sm:$0xf]
      %v235 = vld [vmem:[%s220 + $0x18] sm:$0xf]
      %v236 = vld [vmem:[%s220 + $0x1c] sm:$0xf]
      %v237 = vld [vmem:[%s1] sm:$0xf]
      %v238 = vld [vmem:[%s1 + $0x4] sm:$0xf]
      %v239 = vld [vmem:[%s1 + $0x8] sm:$0xf]
      %v240 = vld [vmem:[%s1 + $0xc] sm:$0xf]
      %v241 = vld [vmem:[%s2] sm:$0x1]
      %v243 = vlaneseq
      %v244 = vshrl.u32 %v243, 7
      %v245 = vsub.s32 0, %v244
      %v246 = vrot.slane %v241, %v245
      %v256 = vunpack.c.l.b16 %v229
      %v257 = vunpack.c.l.b16 %v230
      %v258 = vunpack.c.l.b16 %v231
      %v259 = vunpack.c.l.b16 %v232
      %v260 = vunpack.c.l.b16 %v233
      %v261 = vunpack.c.l.b16 %v234
      %v262 = vunpack.c.l.b16 %v235
      %v263 = vunpack.c.l.b16 %v236
      %v264 = vpack.c.b16 %v257, %v256
      %v265 = vpack.c.b16 %v259, %v258
      %v266 = vpack.c.b16 %v261, %v260
      %v267 = vpack.c.b16 %v263, %v262
      %v272 = vunpack.c.l.b16 %v237
      %v273 = vunpack.c.l.b16 %v238
      %v274 = vunpack.c.l.b16 %v239
      %v275 = vunpack.c.l.b16 %v240
      %v276 = vpack.c.b16 %v273, %v272
      %v277 = vpack.c.b16 %v275, %v274
      %vm280 = vcmask 261120
      %v282 = vsel %vm280, %v264, 0
      %v285 = vsel %vm280, %v265, 0
      %v288 = vsel %vm280, %v266, 0
      %v291 = vsel %vm280, %v267, 0
      %293 = vmatprep.subr.bf16.mxu0 0
      %294 = vmatpush1.bf16.msra.mxu0 0
      %295 = vmatprep.subr.bf16.mxu0 0
      %296 = vmatpush1.bf16.msra.mxu0 0
      %297 = vmatprep.subr.bf16.mxu0 0
      %298 = vmatpush1.bf16.msra.mxu0 0
      %299 = vmatprep.subr.bf16.mxu0 0
      %300 = vmatpush1.bf16.msra.mxu0 0
      %301 = vmatprep.subr.bf16.mxu0 0
      %302 = vmatpush1.bf16.msra.mxu0 0
      %303 = vmatprep.subr.bf16.mxu0 0
      %304 = vmatpush1.bf16.msra.mxu0 0
      %305 = vmatprep.subr.bf16.mxu0 0
      %306 = vmatpush1.bf16.msra.mxu0 %v277
      %307 = vmatprep.subr.bf16.mxu0 0
      %308 = vmatpush1.bf16.msra.mxu0 %v276
      %309 = vmatprep.subr.bf16.mxu0 0
      %310 = vmatpush2.bf16.msra.mxu0 0
      %311 = vmatprep.subr.bf16.mxu0 0
      %312 = vmatpush2.bf16.msra.mxu0 0
      %313 = vmatprep.subr.bf16.mxu0 0
      %314 = vmatpush2.bf16.msra.mxu0 0
      %315 = vmatprep.subr.bf16.mxu0 0
      %316 = vmatpush2.bf16.msra.mxu0 0
      %317 = vmatprep.subr.bf16.mxu0 0
      %318 = vmatpush2.bf16.msra.mxu0 0
      %319 = vmatprep.subr.bf16.mxu0 0
      %320 = vmatpush2.bf16.msra.mxu0 0
      %321 = vmatprep.subr.bf16.mxu0 0
      %322 = vmatpush2.bf16.msra.mxu0 0
      %323 = vmatprep.subr.bf16.mxu0 0
      %324 = vmatpush2.bf16.msra.mxu0 0
      %325 = vmatprep.mubr.bf16.mxu0 0
      %326 = vmatmul.mubr.bf16.gmra.mxu0 %v282
      %v327 = vpop.f32.mrf.mxu0
      %v328 = vadd.f32 %v246, %v327
      %v329 = vpop.f32.mrf.mxu0
      %v330 = vpop.f32.mrf.mxu0
      %v331 = vadd.f32 %v246, %v330
      %v332 = vpop.f32.mrf.mxu0
      %333 = vmatprep.mubr.bf16.mxu0 0
      %334 = vmatmul.mubr.bf16.gmra.mxu0 %v285
      %v335 = vpop.f32.mrf.mxu0
      %v336 = vadd.f32 %v246, %v335
      %v337 = vpop.f32.mrf.mxu0
      %v338 = vpop.f32.mrf.mxu0
      %v339 = vadd.f32 %v246, %v338
      %v340 = vpop.f32.mrf.mxu0
      %341 = vmatprep.mubr.bf16.mxu0 0
      %342 = vmatmul.mubr.bf16.gmra.mxu0 %v288
      %v343 = vpop.f32.mrf.mxu0
      %v344 = vadd.f32 %v246, %v343
      %v345 = vpop.f32.mrf.mxu0
      %v346 = vpop.f32.mrf.mxu0
      %v347 = vadd.f32 %v246, %v346
      %v348 = vpop.f32.mrf.mxu0
      %349 = vmatprep.mubr.bf16.mxu0 0
      %350 = vmatmul.mubr.bf16.gmra.mxu0 %v291
      %v351 = vpop.f32.mrf.mxu0
      %v352 = vadd.f32 %v246, %v351
      %v353 = vpop.f32.mrf.mxu0
      %v354 = vpop.f32.mrf.mxu0
      %v355 = vadd.f32 %v246, %v354
      %v356 = vpop.f32.mrf.mxu0
      %357 = vdwg.mxu0
      %v358 = vmul.f32 %v328, %v328
      %v359 = vmul.f32 %v331, %v331
      %v360 = vmul.f32 %v336, %v336
      %v361 = vmul.f32 %v339, %v339
      %v362 = vmul.f32 %v344, %v344
      %v363 = vmul.f32 %v347, %v347
      %v364 = vmul.f32 %v352, %v352
      %v365 = vmul.f32 %v355, %v355
      %v366 = vpack.c.bf16 %v359, %v358
      %v367 = vpack.c.bf16 %v361, %v360
      %v368 = vpack.c.bf16 %v363, %v362
      %v369 = vpack.c.bf16 %v365, %v364
      %v370 = vld [vmem:[%s3] sm:$0xf]
      %v371 = vld [vmem:[%s3 + $0x4] sm:$0xf]
      %v372 = vld [vmem:[%s3 + $0x8] sm:$0xf]
      %v373 = vld [vmem:[%s3 + $0xc] sm:$0xf]
      %v374 = vld [vmem:[%s3 + $0x10] sm:$0xf]
      %v375 = vld [vmem:[%s3 + $0x14] sm:$0xf]
      %v376 = vld [vmem:[%s3 + $0x18] sm:$0xf]
      %v377 = vld [vmem:[%s3 + $0x1c] sm:$0xf]
      %v378 = vld [vmem:[%s3 + $0x20] sm:$0xf]
      %v379 = vld [vmem:[%s3 + $0x24] sm:$0xf]
      %v380 = vld [vmem:[%s3 + $0x28] sm:$0xf]
      %v381 = vld [vmem:[%s3 + $0x2c] sm:$0xf]
      %v382 = vld [vmem:[%s3 + $0x30] sm:$0xf]
      %v383 = vld [vmem:[%s3 + $0x34] sm:$0xf]
      %v384 = vld [vmem:[%s3 + $0x38] sm:$0xf]
      %v385 = vld [vmem:[%s3 + $0x3c] sm:$0xf]
      %v386 = vld [vmem:[%s4] sm:$0x1]
      %v388 = vlaneseq
      %v389 = vshrl.u32 %v388, 7
      %v390 = vsub.s32 0, %v389
      %v391 = vrot.slane %v386, %v390
      %v409 = vunpack.c.l.b16 %v370
      %v410 = vunpack.c.l.b16 %v371
      %v411 = vunpack.c.l.b16 %v372
      %v412 = vunpack.c.l.b16 %v373
      %v413 = vunpack.c.l.b16 %v374
      %v414 = vunpack.c.l.b16 %v375
      %v415 = vunpack.c.l.b16 %v376
      %v416 = vunpack.c.l.b16 %v377
      %v417 = vunpack.c.l.b16 %v378
      %v418 = vunpack.c.l.b16 %v379
      %v419 = vunpack.c.l.b16 %v380
      %v420 = vunpack.c.l.b16 %v381
      %v421 = vunpack.c.l.b16 %v382
      %v422 = vunpack.c.l.b16 %v383
      %v423 = vunpack.c.l.b16 %v384
      %v424 = vunpack.c.l.b16 %v385
      %v425 = vpack.c.b16 %v410, %v409
      %v426 = vpack.c.b16 %v412, %v411
      %v427 = vpack.c.b16 %v414, %v413
      %v428 = vpack.c.b16 %v416, %v415
      %v429 = vpack.c.b16 %v418, %v417
      %v430 = vpack.c.b16 %v420, %v419
      %v431 = vpack.c.b16 %v422, %v421
      %v432 = vpack.c.b16 %v424, %v423
      %441 = vmatprep.subr.bf16.mxu0 0
      %442 = vmatpush1.bf16.msra.mxu0 %v432
      %443 = vmatprep.subr.bf16.mxu0 0
      %444 = vmatpush1.bf16.msra.mxu0 %v431
      %445 = vmatprep.subr.bf16.mxu0 0
      %446 = vmatpush1.bf16.msra.mxu0 %v430
      %447 = vmatprep.subr.bf16.mxu0 0
      %448 = vmatpush1.bf16.msra.mxu0 %v429
      %449 = vmatprep.subr.bf16.mxu0 0
      %450 = vmatpush1.bf16.msra.mxu0 %v428
      %451 = vmatprep.subr.bf16.mxu0 0
      %452 = vmatpush1.bf16.msra.mxu0 %v427
      %453 = vmatprep.subr.bf16.mxu0 0
      %454 = vmatpush1.bf16.msra.mxu0 %v426
      %455 = vmatprep.subr.bf16.mxu0 0
      %456 = vmatpush1.bf16.msra.mxu0 %v425
      %457 = vmatprep.subr.bf16.mxu0 0
      %458 = vmatpush2.bf16.msra.mxu0 0
      %459 = vmatprep.subr.bf16.mxu0 0
      %460 = vmatpush2.bf16.msra.mxu0 0
      %461 = vmatprep.subr.bf16.mxu0 0
      %462 = vmatpush2.bf16.msra.mxu0 0
      %463 = vmatprep.subr.bf16.mxu0 0
      %464 = vmatpush2.bf16.msra.mxu0 0
      %465 = vmatprep.subr.bf16.mxu0 0
      %466 = vmatpush2.bf16.msra.mxu0 0
      %467 = vmatprep.subr.bf16.mxu0 0
      %468 = vmatpush2.bf16.msra.mxu0 0
      %469 = vmatprep.subr.bf16.mxu0 0
      %470 = vmatpush2.bf16.msra.mxu0 0
      %471 = vmatprep.subr.bf16.mxu0 0
      %472 = vmatpush2.bf16.msra.mxu0 0
      %473 = vmatprep.mubr.bf16.mxu0 0
      %474 = vmatmul.mubr.bf16.gmra.mxu0 %v366
      %v475 = vpop.f32.mrf.mxu0
      %v476 = vadd.f32 %v391, %v475
      %v477 = vpop.f32.mrf.mxu0
      %v478 = vpop.f32.mrf.mxu0
      %v479 = vadd.f32 %v391, %v478
      %v480 = vpop.f32.mrf.mxu0
      %481 = vmatprep.mubr.bf16.mxu0 0
      %482 = vmatmul.mubr.bf16.gmra.mxu0 %v367
      %v483 = vpop.f32.mrf.mxu0
      %v484 = vadd.f32 %v391, %v483
      %v485 = vpop.f32.mrf.mxu0
      %v486 = vpop.f32.mrf.mxu0
      %v487 = vadd.f32 %v391, %v486
      %v488 = vpop.f32.mrf.mxu0
      %489 = vmatprep.mubr.bf16.mxu0 0
      %490 = vmatmul.mubr.bf16.gmra.mxu0 %v368
      %v491 = vpop.f32.mrf.mxu0
      %v492 = vadd.f32 %v391, %v491
      %v493 = vpop.f32.mrf.mxu0
      %v494 = vpop.f32.mrf.mxu0
      %v495 = vadd.f32 %v391, %v494
      %v496 = vpop.f32.mrf.mxu0
      %497 = vmatprep.mubr.bf16.mxu0 0
      %498 = vmatmul.mubr.bf16.gmra.mxu0 %v369
      %v499 = vpop.f32.mrf.mxu0
      %v500 = vadd.f32 %v391, %v499
      %v501 = vpop.f32.mrf.mxu0
      %v502 = vpop.f32.mrf.mxu0
      %v503 = vadd.f32 %v391, %v502
      %v504 = vpop.f32.mrf.mxu0
      %505 = vdwg.mxu0
      %v506 = vrsqrt.pop %v476
      %v507 = vrsqrt.pop %v479
      %v508 = vrsqrt.pop %v484
      %v509 = vrsqrt.pop %v487
      %v510 = vrsqrt.pop %v492
      %v511 = vrsqrt.pop %v495
      %v512 = vrsqrt.pop %v500
      %v513 = vrsqrt.pop %v503
      %v514 = vmul.f32 %v328, %v506
      %v515 = vmul.f32 %v331, %v507
      %v516 = vmul.f32 %v336, %v508
      %v517 = vmul.f32 %v339, %v509
      %v518 = vmul.f32 %v344, %v510
      %v519 = vmul.f32 %v347, %v511
      %v520 = vmul.f32 %v352, %v512
      %v521 = vmul.f32 %v355, %v513
      %v522 = vpack.c.bf16 %v515, %v514
      %v523 = vpack.c.bf16 %v517, %v516
      %v524 = vpack.c.bf16 %v519, %v518
      %v525 = vpack.c.bf16 %v521, %v520
      %v530 = vunpack.c.l.b16 %v522
      %v531 = vunpack.c.h.b16 %v522
      %v532 = vunpack.c.l.b16 %v523
      %v533 = vunpack.c.h.b16 %v523
      %v534 = vunpack.c.l.b16 %v524
      %v535 = vunpack.c.h.b16 %v524
      %v536 = vunpack.c.l.b16 %v525
      %v537 = vunpack.c.h.b16 %v525
      %v538 = vpack.c.b16 %v530, %v530
      %v539 = vpack.c.b16 %v531, %v531
      %v540 = vpack.c.b16 %v532, %v532
      %v541 = vpack.c.b16 %v533, %v533
      %v542 = vpack.c.b16 %v534, %v534
      %v543 = vpack.c.b16 %v535, %v535
      %v544 = vpack.c.b16 %v536, %v536
      %v545 = vpack.c.b16 %v537, %v537
      %554 = vst [vmem:[%s226] sm:$0xf] %v538
      %555 = vst [vmem:[%s226 + $0x4] sm:$0xf] %v539
      %556 = vst [vmem:[%s226 + $0x8] sm:$0xf] %v540
      %557 = vst [vmem:[%s226 + $0xc] sm:$0xf] %v541
      %558 = vst [vmem:[%s226 + $0x10] sm:$0xf] %v542
      %559 = vst [vmem:[%s226 + $0x14] sm:$0xf] %v543
      %560 = vst [vmem:[%s226 + $0x18] sm:$0xf] %v544
      %561 = vst [vmem:[%s226 + $0x1c] sm:$0xf] %v545
      %s562 = smul.u32 8, %s16
      %p563 = scmp.lt.s32.totalorder %s562, 15
      %s564 = scalar_select %p563, %s562, 15
      %s565 = smul.addr %s564, 4
      %s566 = scalar_lea.vmem %s5, %s565
      // Predicated region
      $region41: #{balle2_encoder_forward.4} parent=39 // pred_check
        %p567 = pneg %p144
      $region42: #{balle2_encoder_forward.4} parent=39 // pred_check_branch
        %569 = sbr.rel (%p567) target = $region44
      $region43: #{balle2_encoder_forward.4} parent=39 // pred_region
        %s570 = smul.u32 8, %s16
      $region44: #{balle2_encoder_forward.4} parent=39 // pred_fallthru
        _
    $region40: #{balle2_encoder_forward.4} parent=5 // pred_fallthru
      _
    %p571 = scmp.le.s32.totalorder 2, %s11
    // Predicated region
    $region45: #{balle2_encoder_forward.4} parent=5 // pred_check
      %p572 = pneg %p571
    $region46: #{balle2_encoder_forward.4} parent=5 // pred_check_branch
      %574 = sbr.rel (%p572) target = $region48
    $region47: #{balle2_encoder_forward.4} parent=5 // pred_region
      %s575 = ssub.s32 %s11, 2
      // Predicated region
      $region49: #{balle2_encoder_forward.4} parent=47 // pred_check
        %p576 = pneg %p150
      $region50: #{balle2_encoder_forward.4} parent=47 // pred_check_branch
        %578 = sbr.rel (%p576) target = $region52
      $region51: #{balle2_encoder_forward.4} parent=47 // pred_region
        %s579 = smul.u32 8, %s17
        %p580 = scmp.lt.s32.totalorder %s579, 15
        %s581 = scalar_select %p580, %s579, 15
        %s582 = smul.addr %s581, 4
        %s583 = scalar_lea.vmem %s5, %s582
      $region52: #{balle2_encoder_forward.4} parent=47 // pred_fallthru
        _
    $region48: #{balle2_encoder_forward.4} parent=5 // pred_fallthru
      _
  $region6: #{balle2_encoder_forward.4} parent=0 // loop_footer
    %s15 = sadd.s32 1, %s11
  $region7: #{balle2_encoder_forward.4} parent=0 // loop_footer_branch
    %10 = sbr.rel target = $region3
  $region8: #{balle2_encoder_forward.4} parent=0 // loop_exit
    _

// kernel: balle2_encoder_forward.7
$region0: #{balle2_encoder_forward.7}
  #allocation0 [shape = 'u32[]', space=smem, size = 0x4, offset = 0x4, fixed_abs, tag = 'smem constant byte address 0x4 - core index']
  #allocation1 [shape = 'u32[144,128]{1,0:T(1,128)}', space=vmem, size = 0x12000, scoped, tag = 'internal scratch']
  %s0 = inlined_call_operand.vmem [shape: bf16[2,10,8,96], index: 0, kind: input, shape index: {}]
  %s1 = inlined_call_operand.vmem [shape: bf16[3,96,128], index: 1, kind: input, shape index: {}]
  %s2 = inlined_call_operand.vmem [shape: f32[1,128], index: 2, kind: input, shape index: {}]
  %s3 = inlined_call_operand.vmem [shape: bf16[2,8,8,128], index: 3, kind: output, shape index: {}]
  %s4 = sld [smem:[#allocation0]]
  $region45: #{balle2_encoder_forward.7} parent=0
    _
  %s6 = ssub.s32 1, %s4
  %s7 = scalar_select 0, %s6, %s4
  loop: start=0, step=1, limit=4
  $region2: #{balle2_encoder_forward.7} parent=0 // loop_pre_header
    _
  $region3: #{balle2_encoder_forward.7} parent=0 // loop_header
    %s9 = sphi 0, %s13
    %p10 = scmp.ge.s32.totalorder %s9, 4
    %s16 = sphi 0, %s28
    %s17 = sphi 0, %s24
    %s18 = sphi 0, %s16
    %s19 = sphi 0, %s17
    %s20 = sphi 0, %s18
    %s21 = sphi 0, %s19
    %s31 = sphi 0, %s33
    %s34 = sphi 0, %s31
    %s35 = sphi 0, %s34
    %s51 = sphi 0, %s35
    %s55 = sphi 0, %s55
    %s57 = sphi 0, %s55
    %s58 = sphi 0, %s57
    %s72 = sphi 0, %s58
    %s76 = sphi 0, %s76
    %s78 = sphi 0, %s76
    %s79 = sphi 0, %s78
    %s93 = sphi 0, %s79
    %s101 = sphi 0, %s103
    %s104 = sphi 0, %s101
    %s105 = sphi 0, %s104
    %s121 = sphi 0, %s105
  $region4: #{balle2_encoder_forward.7} parent=0 // loop_header_branch
    %12 = sbr.rel (%p10) target = $region8
  $region5: #{balle2_encoder_forward.7} parent=0 // loop_body
    %s14 = ssub.s32 %s9, 1
    %s15 = ssub.s32 %s9, 2
    %s22 = sadd.s32 1, %s17
    %p23 = scmp.ge.s32.totalorder %s22, 1
    %s24 = scalar_select %p23, 0, %s22
    %s25 = sadd.s32 1, %s16
    %s26 = scalar_select %p23, %s25, %s16
    %p27 = scmp.ge.s32.totalorder %s26, 2
    %s28 = scalar_select %p27, 0, %s26
    %s29 = ssub.s32 %s16, %s28
    %p30 = scmp.eq.s32.totalorder %s29, 0
    %s32 = sadd.s32 %s31, 1
    %s33 = scalar_select %p30, %s31, %s32
    %p36 = pneg %p30
    %p37 = scmp.eq.s32.totalorder %s9, 1
    %p38 = por %p36, %p37
    %p39 = scmp.ne.s32.totalorder %s31, %s34
    %p40 = scmp.eq.s32.totalorder %s9, 0
    %p41 = por %p39, %p40
    %p42 = scmp.ne.s32.totalorder %s31, %s34
    %p43 = scmp.eq.s32.totalorder %s14, 1
    %p44 = por %p42, %p43
    %p45 = scmp.ne.s32.totalorder %s34, %s35
    %p46 = scmp.eq.s32.totalorder %s14, 0
    %p47 = por %p45, %p46
    %p48 = scmp.ne.s32.totalorder %s34, %s35
    %p49 = scmp.eq.s32.totalorder %s15, 1
    %p50 = por %p48, %p49
    %p52 = scmp.ne.s32.totalorder %s35, %s51
    %p53 = scmp.eq.s32.totalorder %s15, 0
    %p54 = por %p52, %p53
    %s56 = sadd.s32 %s55, 1
    %p59 = scmp.eq.s32.totalorder %s9, 1
    %p60 = scmp.ne.s32.totalorder %s55, %s57
    %p61 = scmp.eq.s32.totalorder %s9, 0
    %p62 = por %p60, %p61
    %p63 = scmp.ne.s32.totalorder %s55, %s57
    %p64 = scmp.eq.s32.totalorder %s14, 1
    %p65 = por %p63, %p64
    %p66 = scmp.ne.s32.totalorder %s57, %s58
    %p67 = scmp.eq.s32.totalorder %s14, 0
    %p68 = por %p66, %p67
    %p69 = scmp.ne.s32.totalorder %s57, %s58
    %p70 = scmp.eq.s32.totalorder %s15, 1
    %p71 = por %p69, %p70
    %p73 = scmp.ne.s32.totalorder %s58, %s72
    %p74 = scmp.eq.s32.totalorder %s15, 0
    %p75 = por %p73, %p74
    %s77 = sadd.s32 %s76, 1
    %p80 = scmp.eq.s32.totalorder %s9, 1
    %p81 = scmp.ne.s32.totalorder %s76, %s78
    %p82 = scmp.eq.s32.totalorder %s9, 0
    %p83 = por %p81, %p82
    %p84 = scmp.ne.s32.totalorder %s76, %s78
    %p85 = scmp.eq.s32.totalorder %s14, 1
    %p86 = por %p84, %p85
    %p87 = scmp.ne.s32.totalorder %s78, %s79
    %p88 = scmp.eq.s32.totalorder %s14, 0
    %p89 = por %p87, %p88
    %p90 = scmp.ne.s32.totalorder %s78, %s79
    %p91 = scmp.eq.s32.totalorder %s15, 1
    %p92 = por %p90, %p91
    %p94 = scmp.ne.s32.totalorder %s79, %s93
    %p95 = scmp.eq.s32.totalorder %s15, 0
    %p96 = por %p94, %p95
    %s97 = ssub.s32 %s16, %s28
    %s98 = ssub.s32 %s17, %s24
    %s99 = sor.u32 %s97, %s98
    %p100 = scmp.eq.s32.totalorder %s99, 0
    %s102 = sadd.s32 %s101, 1
    %s103 = scalar_select %p100, %s101, %s102
    %p106 = pneg %p100
    %p107 = scmp.eq.s32.totalorder %s9, 1
    %p108 = por %p106, %p107
    %p109 = scmp.ne.s32.totalorder %s101, %s104
    %p110 = scmp.eq.s32.totalorder %s9, 0
    %p111 = por %p109, %p110
    %p112 = scmp.ne.s32.totalorder %s101, %s104
    %p113 = scmp.eq.s32.totalorder %s14, 1
    %p114 = por %p112, %p113
    %p115 = scmp.ne.s32.totalorder %s104, %s105
    %p116 = scmp.eq.s32.totalorder %s14, 0
    %p117 = por %p115, %p116
    %p118 = scmp.ne.s32.totalorder %s104, %s105
    %p119 = scmp.eq.s32.totalorder %s15, 1
    %p120 = por %p118, %p119
    %p122 = scmp.ne.s32.totalorder %s105, %s121
    %p123 = scmp.eq.s32.totalorder %s15, 0
    %p124 = por %p122, %p123
    %p125 = scmp.le.s32.totalorder 1, %s9
    %p126 = scmp.lt.s32.totalorder %s9, 3
    %p127 = pnand %p125, %p126
    %p128 = pneg %p127
    // Predicated region
    $region9: #{balle2_encoder_forward.7} parent=5 // pred_check
      _
    $region10: #{balle2_encoder_forward.7} parent=5 // pred_check_branch
      %130 = sbr.rel (%p127) target = $region12
    $region11: #{balle2_encoder_forward.7} parent=5 // pred_region
      %s131 = ssub.s32 %s9, 1
      // Predicated region
      $region13: #{balle2_encoder_forward.7} parent=11 // pred_check
        %p132 = pneg %p68
      $region14: #{balle2_encoder_forward.7} parent=11 // pred_check_branch
        %134 = sbr.rel (%p132) target = $region16
      $region15: #{balle2_encoder_forward.7} parent=11 // pred_region
        _
      $region16: #{balle2_encoder_forward.7} parent=11 // pred_fallthru
        _
      // Predicated region
      $region17: #{balle2_encoder_forward.7} parent=11 // pred_check
        %p135 = pneg %p89
      $region18: #{balle2_encoder_forward.7} parent=11 // pred_check_branch
        %137 = sbr.rel (%p135) target = $region20
      $region19: #{balle2_encoder_forward.7} parent=11 // pred_region
        _
      $region20: #{balle2_encoder_forward.7} parent=11 // pred_fallthru
        _
    $region12: #{balle2_encoder_forward.7} parent=5 // pred_fallthru
      _
    %p138 = scmp.lt.s32.totalorder %s9, 2
    // Predicated region
    $region21: #{balle2_encoder_forward.7} parent=5 // pred_check
      %p139 = pneg %p138
    $region22: #{balle2_encoder_forward.7} parent=5 // pred_check_branch
      %141 = sbr.rel (%p139) target = $region24
    $region23: #{balle2_encoder_forward.7} parent=5 // pred_region
      // Predicated region
      $region25: #{balle2_encoder_forward.7} parent=23 // pred_check
        %p142 = pneg %p41
      $region26: #{balle2_encoder_forward.7} parent=23 // pred_check_branch
        %144 = sbr.rel (%p142) target = $region28
      $region27: #{balle2_encoder_forward.7} parent=23 // pred_region
        %p145 = scmp.lt.s32.totalorder %s16, 1
        %s146 = scalar_select %p145, %s16, 1
        %s147 = smul.addr %s146, 10
        %s148 = smul.addr %s147, 4
        %s149 = scalar_lea.vmem %s0, %s148
      $region28: #{balle2_encoder_forward.7} parent=23 // pred_fallthru
        _
    $region24: #{balle2_encoder_forward.7} parent=5 // pred_fallthru
      _
    %p150 = scmp.le.s32.totalorder 1, %s9
    %p151 = scmp.lt.s32.totalorder %s9, 3
    %p152 = pnand %p150, %p151
    %p153 = pneg %p152
    // Predicated region
    $region29: #{balle2_encoder_forward.7} parent=5 // pred_check
      _
    $region30: #{balle2_encoder_forward.7} parent=5 // pred_check_branch
      %155 = sbr.rel (%p152) target = $region32
    $region31: #{balle2_encoder_forward.7} parent=5 // pred_region
      %s156 = ssub.s32 %s9, 1
      %p157 = scmp.lt.s32.totalorder %s18, 1
      %s158 = scalar_select %p157, %s18, 1
      %s159 = smul.addr %s158, 10
      %s160 = smul.addr %s159, 4
      %s161 = scalar_lea.vmem %s0, %s160
      %p162 = pneg %p47
      %p163 = pneg %p44
      %p164 = pneg %p68
      %p165 = pneg %p65
      %p166 = pneg %p89
      %p167 = pneg %p86
      %p168 = pneg %p117
      %p169 = pneg %p114
      %s170 = smul.u32 8, %s19
      %p171 = scmp.lt.s32.totalorder %s18, 1
      %s172 = scalar_select %p171, %s18, 1
      %p173 = scmp.lt.s32.totalorder %s170, 7
      %s174 = scalar_select %p173, %s170, 7
      %s175 = smul.addr %s172, 8
      %s176 = sadd.s32 %s174, %s175
      %s177 = smul.addr %s176, 4
      %s178 = scalar_lea.vmem %s3, %s177
      %p179 = scmp.lt.s32.totalorder %s18, 1
      %s180 = scalar_select %p179, %s18, 1
      %s181 = smul.addr %s180, 10
      %s182 = smul.addr %s181, 4
      %s183 = scalar_lea.vmem %s0, %s182
      %s184 = smul.u32 8, %s19
      %p185 = scmp.lt.s32.totalorder %s18, 1
      %s186 = scalar_select %p185, %s18, 1
      %p187 = scmp.lt.s32.totalorder %s184, 7
      %s188 = scalar_select %p187, %s184, 7
      %s189 = smul.addr %s186, 8
      %s190 = sadd.s32 %s188, %s189
      %s191 = smul.addr %s190, 4
      %s192 = scalar_lea.vmem %s3, %s191
      %s193 = smul.u32 8, %s19
      %s195 = smul.u32 %s19, 8
      %s196 = smul.addr %s195, 4
      %s197 = scalar_lea.vmem %s183, %s196
      %v198 = vld [vmem:[%s197] sm:$0xf]
      %v199 = vld [vmem:[%s197 + $0x4] sm:$0xf]
      %v200 = vld [vmem:[%s197 + $0x8] sm:$0xf]
      %v201 = vld [vmem:[%s197 + $0xc] sm:$0xf]
      %v202 = vld [vmem:[%s197 + $0x10] sm:$0xf]
      %v203 = vld [vmem:[%s197 + $0x14] sm:$0xf]
      %v204 = vld [vmem:[%s197 + $0x18] sm:$0xf]
      %v205 = vld [vmem:[%s197 + $0x1c] sm:$0xf]
      %v206 = vld [vmem:[%s1] sm:$0xf]
      %v207 = vld [vmem:[%s1 + $0x4] sm:$0xf]
      %v208 = vld [vmem:[%s1 + $0x8] sm:$0xf]
      %v209 = vld [vmem:[%s1 + $0xc] sm:$0xf]
      %v210 = vld [vmem:[%s1 + $0x10] sm:$0xf]
      %v211 = vld [vmem:[%s1 + $0x14] sm:$0xf]
      %v212 = vld [vmem:[%s1 + $0x18] sm:$0xf]
      %v213 = vld [vmem:[%s1 + $0x1c] sm:$0xf]
      %v214 = vld [vmem:[%s1 + $0x20] sm:$0xf]
      %v215 = vld [vmem:[%s1 + $0x24] sm:$0xf]
      %v216 = vld [vmem:[%s1 + $0x28] sm:$0xf]
      %v217 = vld [vmem:[%s1 + $0x2c] sm:$0xf]
      %s218 = sadd.s32 %s195, 1
      %s219 = smul.addr %s218, 4
      %s220 = scalar_lea.vmem %s183, %s219
      %v221 = vld [vmem:[%s220] sm:$0xf]
      %v222 = vld [vmem:[%s220 + $0x4] sm:$0xf]
      %v223 = vld [vmem:[%s220 + $0x8] sm:$0xf]
      %v224 = vld [vmem:[%s220 + $0xc] sm:$0xf]
      %v225 = vld [vmem:[%s220 + $0x10] sm:$0xf]
      %v226 = vld [vmem:[%s220 + $0x14] sm:$0xf]
      %v227 = vld [vmem:[%s220 + $0x18] sm:$0xf]
      %v228 = vld [vmem:[%s220 + $0x1c] sm:$0xf]
      %s229 = scalar_lea.vmem %s1, 48
      %v230 = vld [vmem:[%s229] sm:$0xf]
      %v231 = vld [vmem:[%s229 + $0x4] sm:$0xf]
      %v232 = vld [vmem:[%s229 + $0x8] sm:$0xf]
      %v233 = vld [vmem:[%s229 + $0xc] sm:$0xf]
      %v234 = vld [vmem:[%s229 + $0x10] sm:$0xf]
      %v235 = vld [vmem:[%s229 + $0x14] sm:$0xf]
      %v236 = vld [vmem:[%s229 + $0x18] sm:$0xf]
      %v237 = vld [vmem:[%s229 + $0x1c] sm:$0xf]
      %v238 = vld [vmem:[%s229 + $0x20] sm:$0xf]
      %v239 = vld [vmem:[%s229 + $0x24] sm:$0xf]
      %v240 = vld [vmem:[%s229 + $0x28] sm:$0xf]
      %v241 = vld [vmem:[%s229 + $0x2c] sm:$0xf]
      %v250 = vunpack.c.l.b16 %v221
      %v251 = vunpack.c.l.b16 %v222
      %v252 = vunpack.c.l.b16 %v223
      %v253 = vunpack.c.l.b16 %v224
      %v254 = vunpack.c.l.b16 %v225
      %v255 = vunpack.c.l.b16 %v226
      %v256 = vunpack.c.l.b16 %v227
      %v257 = vunpack.c.l.b16 %v228
      %v258 = vpack.c.b16 %v251, %v250
      %v259 = vpack.c.b16 %v253, %v252
      %v260 = vpack.c.b16 %v255, %v254
      %v261 = vpack.c.b16 %v257, %v256
      %v274 = vunpack.c.l.b16 %v230
      %v275 = vunpack.c.l.b16 %v231
      %v276 = vunpack.c.l.b16 %v232
      %v277 = vunpack.c.l.b16 %v233
      %v278 = vunpack.c.l.b16 %v234
      %v279 = vunpack.c.l.b16 %v235
      %v280 = vunpack.c.l.b16 %v236
      %v281 = vunpack.c.l.b16 %v237
      %v282 = vunpack.c.l.b16 %v238
      %v283 = vunpack.c.l.b16 %v239
      %v284 = vunpack.c.l.b16 %v240
      %v285 = vunpack.c.l.b16 %v241
      %v286 = vpack.c.b16 %v275, %v274
      %v287 = vpack.c.b16 %v277, %v276
      %v288 = vpack.c.b16 %v279, %v278
      %v289 = vpack.c.b16 %v281, %v280
      %v290 = vpack.c.b16 %v283, %v282
      %v291 = vpack.c.b16 %v285, %v284
      %vm298 = vcmask 785408
      %v300 = vsel %vm298, %v258, 0
      %v303 = vsel %vm298, %v259, 0
      %v306 = vsel %vm298, %v260, 0
      %v309 = vsel %vm298, %v261, 0
      %311 = vmatprep.subr.bf16.mxu0 0
      %312 = vmatpush1.bf16.msra.mxu0 0
      %313 = vmatprep.subr.bf16.mxu0 0
      %314 = vmatpush1.bf16.msra.mxu0 0
      %315 = vmatprep.subr.bf16.mxu0 0
      %316 = vmatpush1.bf16.msra.mxu0 %v291
      %317 = vmatprep.subr.bf16.mxu0 0
      %318 = vmatpush1.bf16.msra.mxu0 %v290
      %319 = vmatprep.subr.bf16.mxu0 0
      %320 = vmatpush1.bf16.msra.mxu0 %v289
      %321 = vmatprep.subr.bf16.mxu0 0
      %322 = vmatpush1.bf16.msra.mxu0 %v288
      %323 = vmatprep.subr.bf16.mxu0 0
      %324 = vmatpush1.bf16.msra.mxu0 %v287
      %325 = vmatprep.subr.bf16.mxu0 0
      %326 = vmatpush1.bf16.msra.mxu0 %v286
      %327 = vmatprep.subr.bf16.mxu0 0
      %328 = vmatpush2.bf16.msra.mxu0 0
      %329 = vmatprep.subr.bf16.mxu0 0
      %330 = vmatpush2.bf16.msra.mxu0 0
      %331 = vmatprep.subr.bf16.mxu0 0
      %332 = vmatpush2.bf16.msra.mxu0 0
      %333 = vmatprep.subr.bf16.mxu0 0
      %334 = vmatpush2.bf16.msra.mxu0 0
      %335 = vmatprep.subr.bf16.mxu0 0
      %336 = vmatpush2.bf16.msra.mxu0 0
      %337 = vmatprep.subr.bf16.mxu0 0
      %338 = vmatpush2.bf16.msra.mxu0 0
      %339 = vmatprep.subr.bf16.mxu0 0
      %340 = vmatpush2.bf16.msra.mxu0 0
      %341 = vmatprep.subr.bf16.mxu0 0
      %342 = vmatpush2.bf16.msra.mxu0 0
      %343 = vmatprep.mubr.bf16.mxu0 0
      %344 = vmatmul.mubr.bf16.gmra.mxu0 %v300
      %v345 = vpop.f32.mrf.mxu0
      %v346 = vadd.f32 0.0, %v345
      %v347 = vpop.f32.mrf.mxu0
      %v348 = vpop.f32.mrf.mxu0
      %v349 = vadd.f32 0.0, %v348
      %v350 = vpop.f32.mrf.mxu0
      %351 = vmatprep.mubr.bf16.mxu0 0
      %352 = vmatmul.mubr.bf16.gmra.mxu0 %v303
      %v353 = vpop.f32.mrf.mxu0
      %v354 = vadd.f32 0.0, %v353
      %v355 = vpop.f32.mrf.mxu0
      %v356 = vpop.f32.mrf.mxu0
      %v357 = vadd.f32 0.0, %v356
      %v358 = vpop.f32.mrf.mxu0
      %359 = vmatprep.mubr.bf16.mxu0 0
      %360 = vmatmul.mubr.bf16.gmra.mxu0 %v306
      %v361 = vpop.f32.mrf.mxu0
      %v362 = vadd.f32 0.0, %v361
      %v363 = vpop.f32.mrf.mxu0
      %v364 = vpop.f32.mrf.mxu0
      %v365 = vadd.f32 0.0, %v364
      %v366 = vpop.f32.mrf.mxu0
      %367 = vmatprep.mubr.bf16.mxu0 0
      %368 = vmatmul.mubr.bf16.gmra.mxu0 %v309
      %v369 = vpop.f32.mrf.mxu0
      %v370 = vadd.f32 0.0, %v369
      %v371 = vpop.f32.mrf.mxu0
      %v372 = vpop.f32.mrf.mxu0
      %v373 = vadd.f32 0.0, %v372
      %v374 = vpop.f32.mrf.mxu0
      %375 = vdwg.mxu0
      %v384 = vunpack.c.l.b16 %v198
      %v385 = vunpack.c.l.b16 %v199
      %v386 = vunpack.c.l.b16 %v200
      %v387 = vunpack.c.l.b16 %v201
      %v388 = vunpack.c.l.b16 %v202
      %v389 = vunpack.c.l.b16 %v203
      %v390 = vunpack.c.l.b16 %v204
      %v391 = vunpack.c.l.b16 %v205
      %v392 = vpack.c.b16 %v385, %v384
      %v393 = vpack.c.b16 %v387, %v386
      %v394 = vpack.c.b16 %v389, %v388
      %v395 = vpack.c.b16 %v391, %v390
      %v408 = vunpack.c.l.b16 %v206
      %v409 = vunpack.c.l.b16 %v207
      %v410 = vunpack.c.l.b16 %v208
      %v411 = vunpack.c.l.b16 %v209
      %v412 = vunpack.c.l.b16 %v210
      %v413 = vunpack.c.l.b16 %v211
      %v414 = vunpack.c.l.b16 %v212
      %v415 = vunpack.c.l.b16 %v213
      %v416 = vunpack.c.l.b16 %v214
      %v417 = vunpack.c.l.b16 %v215
      %v418 = vunpack.c.l.b16 %v216
      %v419 = vunpack.c.l.b16 %v217
      %v420 = vpack.c.b16 %v409, %v408
      %v421 = vpack.c.b16 %v411, %v410
      %v422 = vpack.c.b16 %v413, %v412
      %v423 = vpack.c.b16 %v415, %v414
      %v424 = vpack.c.b16 %v417, %v416
      %v425 = vpack.c.b16 %v419, %v418
      %v433 = vsel %vm298, %v392, 0
      %v436 = vsel %vm298, %v393, 0
      %v439 = vsel %vm298, %v394, 0
      %v442 = vsel %vm298, %v395, 0
      %444 = vmatprep.subr.bf16.mxu0 0
      %445 = vmatpush1.bf16.msra.mxu0 0
      %446 = vmatprep.subr.bf16.mxu0 0
      %447 = vmatpush1.bf16.msra.mxu0 0
      %448 = vmatprep.subr.bf16.mxu0 0
      %449 = vmatpush1.bf16.msra.mxu0 %v425
      %450 = vmatprep.subr.bf16.mxu0 0
      %451 = vmatpush1.bf16.msra.mxu0 %v424
      %452 = vmatprep.subr.bf16.mxu0 0
      %453 = vmatpush1.bf16.msra.mxu0 %v423
      %454 = vmatprep.subr.bf16.mxu0 0
      %455 = vmatpush1.bf16.msra.mxu0 %v422
      %456 = vmatprep.subr.bf16.mxu0 0
      %457 = vmatpush1.bf16.msra.mxu0 %v421
      %458 = vmatprep.subr.bf16.mxu0 0
      %459 = vmatpush1.bf16.msra.mxu0 %v420
      %460 = vmatprep.subr.bf16.mxu0 0
      %461 = vmatpush2.bf16.msra.mxu0 0
      %462 = vmatprep.subr.bf16.mxu0 0
      %463 = vmatpush2.bf16.msra.mxu0 0
      %464 = vmatprep.subr.bf16.mxu0 0
      %465 = vmatpush2.bf16.msra.mxu0 0
      %466 = vmatprep.subr.bf16.mxu0 0
      %467 = vmatpush2.bf16.msra.mxu0 0
      %468 = vmatprep.subr.bf16.mxu0 0
      %469 = vmatpush2.bf16.msra.mxu0 0
      %470 = vmatprep.subr.bf16.mxu0 0
      %471 = vmatpush2.bf16.msra.mxu0 0
      %472 = vmatprep.subr.bf16.mxu0 0
      %473 = vmatpush2.bf16.msra.mxu0 0
      %474 = vmatprep.subr.bf16.mxu0 0
      %475 = vmatpush2.bf16.msra.mxu0 0
      %476 = vmatprep.mubr.bf16.mxu0 0
      %477 = vmatmul.mubr.bf16.gmra.mxu0 %v433
      %v478 = vpop.f32.mrf.mxu0
      %v479 = vadd.f32 %v346, %v478
      %v480 = vpop.f32.mrf.mxu0
      %v481 = vpop.f32.mrf.mxu0
      %v482 = vadd.f32 %v349, %v481
      %v483 = vpop.f32.mrf.mxu0
      %484 = vmatprep.mubr.bf16.mxu0 0
      %485 = vmatmul.mubr.bf16.gmra.mxu0 %v436
      %v486 = vpop.f32.mrf.mxu0
      %v487 = vadd.f32 %v354, %v486
      %v488 = vpop.f32.mrf.mxu0
      %v489 = vpop.f32.mrf.mxu0
      %v490 = vadd.f32 %v357, %v489
      %v491 = vpop.f32.mrf.mxu0
      %492 = vmatprep.mubr.bf16.mxu0 0
      %493 = vmatmul.mubr.bf16.gmra.mxu0 %v439
      %v494 = vpop.f32.mrf.mxu0
      %v495 = vadd.f32 %v362, %v494
      %v496 = vpop.f32.mrf.mxu0
      %v497 = vpop.f32.mrf.mxu0
      %v498 = vadd.f32 %v365, %v497
      %v499 = vpop.f32.mrf.mxu0
      %500 = vmatprep.mubr.bf16.mxu0 0
      %501 = vmatmul.mubr.bf16.gmra.mxu0 %v442
      %v502 = vpop.f32.mrf.mxu0
      %v503 = vadd.f32 %v370, %v502
      %v504 = vpop.f32.mrf.mxu0
      %v505 = vpop.f32.mrf.mxu0
      %v506 = vadd.f32 %v373, %v505
      %v507 = vpop.f32.mrf.mxu0
      %508 = vdwg.mxu0
      %s509 = sadd.s32 %s195, 2
      %s510 = smul.addr %s509, 4
      %s511 = scalar_lea.vmem %s183, %s510
      %v512 = vld [vmem:[%s511] sm:$0xf]
      %v513 = vld [vmem:[%s511 + $0x4] sm:$0xf]
      %v514 = vld [vmem:[%s511 + $0x8] sm:$0xf]
      %v515 = vld [vmem:[%s511 + $0xc] sm:$0xf]
      %v516 = vld [vmem:[%s511 + $0x10] sm:$0xf]
      %v517 = vld [vmem:[%s511 + $0x14] sm:$0xf]
      %v518 = vld [vmem:[%s511 + $0x18] sm:$0xf]
      %v519 = vld [vmem:[%s511 + $0x1c] sm:$0xf]
      %s520 = scalar_lea.vmem %s1, 96
      %v521 = vld [vmem:[%s520] sm:$0xf]
      %v522 = vld [vmem:[%s520 + $0x4] sm:$0xf]
      %v523 = vld [vmem:[%s520 + $0x8] sm:$0xf]
      %v524 = vld [vmem:[%s520 + $0xc] sm:$0xf]
      %v525 = vld [vmem:[%s520 + $0x10] sm:$0xf]
      %v526 = vld [vmem:[%s520 + $0x14] sm:$0xf]
      %v527 = vld [vmem:[%s520 + $0x18] sm:$0xf]
      %v528 = vld [vmem:[%s520 + $0x1c] sm:$0xf]
      %v529 = vld [vmem:[%s520 + $0x20] sm:$0xf]
      %v530 = vld [vmem:[%s520 + $0x24] sm:$0xf]
      %v531 = vld [vmem:[%s520 + $0x28] sm:$0xf]
      %v532 = vld [vmem:[%s520 + $0x2c] sm:$0xf]
      %v541 = vunpack.c.l.b16 %v512
      %v542 = vunpack.c.l.b16 %v513
      %v543 = vunpack.c.l.b16 %v514
      %v544 = vunpack.c.l.b16 %v515
      %v545 = vunpack.c.l.b16 %v516
      %v546 = vunpack.c.l.b16 %v517
      %v547 = vunpack.c.l.b16 %v518
      %v548 = vunpack.c.l.b16 %v519
      %v549 = vpack.c.b16 %v542, %v541
      %v550 = vpack.c.b16 %v544, %v543
      %v551 = vpack.c.b16 %v546, %v545
      %v552 = vpack.c.b16 %v548, %v547
      %v565 = vunpack.c.l.b16 %v521
      %v566 = vunpack.c.l.b16 %v522
      %v567 = vunpack.c.l.b16 %v523
      %v568 = vunpack.c.l.b16 %v524
      %v569 = vunpack.c.l.b16 %v525
      %v570 = vunpack.c.l.b16 %v526
      %v571 = vunpack.c.l.b16 %v527
      %v572 = vunpack.c.l.b16 %v528
      %v573 = vunpack.c.l.b16 %v529
      %v574 = vunpack.c.l.b16 %v530
      %v575 = vunpack.c.l.b16 %v531
      %v576 = vunpack.c.l.b16 %v532
      %v577 = vpack.c.b16 %v566, %v565
      %v578 = vpack.c.b16 %v568, %v567
      %v579 = vpack.c.b16 %v570, %v569
      %v580 = vpack.c.b16 %v572, %v571
      %v581 = vpack.c.b16 %v574, %v573
      %v582 = vpack.c.b16 %v576, %v575
      %v590 = vsel %vm298, %v549, 0
      %v593 = vsel %vm298, %v550, 0
      %v596 = vsel %vm298, %v551, 0
      %v599 = vsel %vm298, %v552, 0
      %601 = vmatprep.subr.bf16.mxu0 0
      %602 = vmatpush1.bf16.msra.mxu0 0
      %603 = vmatprep.subr.bf16.mxu0 0
      %604 = vmatpush1.bf16.msra.mxu0 0
      %605 = vmatprep.subr.bf16.mxu0 0
      %606 = vmatpush1.bf16.msra.mxu0 %v582
      %607 = vmatprep.subr.bf16.mxu0 0
      %608 = vmatpush1.bf16.msra.mxu0 %v581
      %609 = vmatprep.subr.bf16.mxu0 0
      %610 = vmatpush1.bf16.msra.mxu0 %v580
      %611 = vmatprep.subr.bf16.mxu0 0
      %612 = vmatpush1.bf16.msra.mxu0 %v579
      %613 = vmatprep.subr.bf16.mxu0 0
      %614 = vmatpush1.bf16.msra.mxu0 %v578
      %615 = vmatprep.subr.bf16.mxu0 0
      %616 = vmatpush1.bf16.msra.mxu0 %v577
      %617 = vmatprep.subr.bf16.mxu0 0
      %618 = vmatpush2.bf16.msra.mxu0 0
      %619 = vmatprep.subr.bf16.mxu0 0
      %620 = vmatpush2.bf16.msra.mxu0 0
      %621 = vmatprep.subr.bf16.mxu0 0
      %622 = vmatpush2.bf16.msra.mxu0 0
      %623 = vmatprep.subr.bf16.mxu0 0
      %624 = vmatpush2.bf16.msra.mxu0 0
      %625 = vmatprep.subr.bf16.mxu0 0
      %626 = vmatpush2.bf16.msra.mxu0 0
      %627 = vmatprep.subr.bf16.mxu0 0
      %628 = vmatpush2.bf16.msra.mxu0 0
      %629 = vmatprep.subr.bf16.mxu0 0
      %630 = vmatpush2.bf16.msra.mxu0 0
      %631 = vmatprep.subr.bf16.mxu0 0
      %632 = vmatpush2.bf16.msra.mxu0 0
      %633 = vmatprep.mubr.bf16.mxu0 0
      %634 = vmatmul.mubr.bf16.gmra.mxu0 %v590
      %v635 = vpop.f32.mrf.mxu0
      %v636 = vadd.f32 0.0, %v635
      %v637 = vpop.f32.mrf.mxu0
      %v638 = vpop.f32.mrf.mxu0
      %v639 = vadd.f32 0.0, %v638
      %v640 = vpop.f32.mrf.mxu0
      %641 = vmatprep.mubr.bf16.mxu0 0
      %642 = vmatmul.mubr.bf16.gmra.mxu0 %v593
      %v643 = vpop.f32.mrf.mxu0
      %v644 = vadd.f32 0.0, %v643
      %v645 = vpop.f32.mrf.mxu0
      %v646 = vpop.f32.mrf.mxu0
      %v647 = vadd.f32 0.0, %v646
      %v648 = vpop.f32.mrf.mxu0
      %649 = vmatprep.mubr.bf16.mxu0 0
      %650 = vmatmul.mubr.bf16.gmra.mxu0 %v596
      %v651 = vpop.f32.mrf.mxu0
      %v652 = vadd.f32 0.0, %v651
      %v653 = vpop.f32.mrf.mxu0
      %v654 = vpop.f32.mrf.mxu0
      %v655 = vadd.f32 0.0, %v654
      %v656 = vpop.f32.mrf.mxu0
      %657 = vmatprep.mubr.bf16.mxu0 0
      %658 = vmatmul.mubr.bf16.gmra.mxu0 %v599
      %v659 = vpop.f32.mrf.mxu0
      %v660 = vadd.f32 0.0, %v659
      %v661 = vpop.f32.mrf.mxu0
      %v662 = vpop.f32.mrf.mxu0
      %v663 = vadd.f32 0.0, %v662
      %v664 = vpop.f32.mrf.mxu0
      %665 = vdwg.mxu0
      %v666 = vadd.f32 %v479, %v636
      %v667 = vadd.f32 %v482, %v639
      %v668 = vadd.f32 %v487, %v644
      %v669 = vadd.f32 %v490, %v647
      %v670 = vadd.f32 %v495, %v652
      %v671 = vadd.f32 %v498, %v655
      %v672 = vadd.f32 %v503, %v660
      %v673 = vadd.f32 %v506, %v663
      %v674 = vld [vmem:[%s2] sm:$0x1]
      %v676 = vlaneseq
      %v677 = vshrl.u32 %v676, 7
      %v678 = vsub.s32 0, %v677
      %v679 = vrot.slane %v674, %v678
      %v681 = vadd.f32 %v666, %v679
      %v682 = vadd.f32 %v667, %v679
      %v683 = vadd.f32 %v668, %v679
      %v684 = vadd.f32 %v669, %v679
      %v685 = vadd.f32 %v670, %v679
      %v686 = vadd.f32 %v671, %v679
      %v687 = vadd.f32 %v672, %v679
      %v688 = vadd.f32 %v673, %v679
      %v689 = vpack.c.bf16 %v682, %v681
      %v690 = vpack.c.bf16 %v684, %v683
      %v691 = vpack.c.bf16 %v686, %v685
      %v692 = vpack.c.bf16 %v688, %v687
      %v697 = vunpack.c.l.b16 %v689
      %v698 = vunpack.c.h.b16 %v689
      %v699 = vunpack.c.l.b16 %v690
      %v700 = vunpack.c.h.b16 %v690
      %v701 = vunpack.c.l.b16 %v691
      %v702 = vunpack.c.h.b16 %v691
      %v703 = vunpack.c.l.b16 %v692
      %v704 = vunpack.c.h.b16 %v692
      %v705 = vpack.c.b16 %v697, %v697
      %v706 = vpack.c.b16 %v698, %v698
      %v707 = vpack.c.b16 %v699, %v699
      %v708 = vpack.c.b16 %v700, %v700
      %v709 = vpack.c.b16 %v701, %v701
      %v710 = vpack.c.b16 %v702, %v702
      %v711 = vpack.c.b16 %v703, %v703
      %v712 = vpack.c.b16 %v704, %v704
      %721 = vst [vmem:[%s192] sm:$0xf] %v705
      %722 = vst [vmem:[%s192 + $0x4] sm:$0xf] %v706
      %723 = vst [vmem:[%s192 + $0x8] sm:$0xf] %v707
      %724 = vst [vmem:[%s192 + $0xc] sm:$0xf] %v708
      %725 = vst [vmem:[%s192 + $0x10] sm:$0xf] %v709
      %726 = vst [vmem:[%s192 + $0x14] sm:$0xf] %v710
      %727 = vst [vmem:[%s192 + $0x18] sm:$0xf] %v711
      %728 = vst [vmem:[%s192 + $0x1c] sm:$0xf] %v712
      %s729 = smul.u32 8, %s19
      %p730 = scmp.lt.s32.totalorder %s18, 1
      %s731 = scalar_select %p730, %s18, 1
      %p732 = scmp.lt.s32.totalorder %s729, 7
      %s733 = scalar_select %p732, %s729, 7
      %s734 = smul.addr %s731, 8
      %s735 = sadd.s32 %s733, %s734
      %s736 = smul.addr %s735, 4
      %s737 = scalar_lea.vmem %s3, %s736
      // Predicated region
      $region33: #{balle2_encoder_forward.7} parent=31 // pred_check
        %p738 = pneg %p114
      $region34: #{balle2_encoder_forward.7} parent=31 // pred_check_branch
        %740 = sbr.rel (%p738) target = $region36
      $region35: #{balle2_encoder_forward.7} parent=31 // pred_region
        %s741 = smul.u32 8, %s19
      $region36: #{balle2_encoder_forward.7} parent=31 // pred_fallthru
        _
    $region32: #{balle2_encoder_forward.7} parent=5 // pred_fallthru
      _
    %p742 = scmp.le.s32.totalorder 2, %s9
    // Predicated region
    $region37: #{balle2_encoder_forward.7} parent=5 // pred_check
      %p743 = pneg %p742
    $region38: #{balle2_encoder_forward.7} parent=5 // pred_check_branch
      %745 = sbr.rel (%p743) target = $region40
    $region39: #{balle2_encoder_forward.7} parent=5 // pred_region
      %s746 = ssub.s32 %s9, 2
      // Predicated region
      $region41: #{balle2_encoder_forward.7} parent=39 // pred_check
        %p747 = pneg %p120
      $region42: #{balle2_encoder_forward.7} parent=39 // pred_check_branch
        %749 = sbr.rel (%p747) target = $region44
      $region43: #{balle2_encoder_forward.7} parent=39 // pred_region
        %s750 = smul.u32 8, %s21
        %p751 = scmp.lt.s32.totalorder %s20, 1
        %s752 = scalar_select %p751, %s20, 1
        %p753 = scmp.lt.s32.totalorder %s750, 7
        %s754 = scalar_select %p753, %s750, 7
        %s755 = smul.addr %s752, 8
        %s756 = sadd.s32 %s754, %s755
        %s757 = smul.addr %s756, 4
        %s758 = scalar_lea.vmem %s3, %s757
      $region44: #{balle2_encoder_forward.7} parent=39 // pred_fallthru
        _
    $region40: #{balle2_encoder_forward.7} parent=5 // pred_fallthru
      _
  $region6: #{balle2_encoder_forward.7} parent=0 // loop_footer
    %s13 = sadd.s32 1, %s9
  $region7: #{balle2_encoder_forward.7} parent=0 // loop_footer_branch
    %8 = sbr.rel target = $region3
  $region8: #{balle2_encoder_forward.7} parent=0 // loop_exit
    _

// kernel: balle2_encoder_forward.5
$region0: #{balle2_encoder_forward.5}
  #allocation0 [shape = 'u32[]', space=smem, size = 0x4, offset = 0x4, fixed_abs, tag = 'smem constant byte address 0x4 - core index']
  #allocation1 [shape = 'u32[144,128]{1,0:T(1,128)}', space=vmem, size = 0x12000, scoped, tag = 'internal scratch']
  %s0 = inlined_call_operand.vmem [shape: bf16[2,10,8,96], index: 0, kind: input, shape index: {}]
  %s1 = inlined_call_operand.vmem [shape: bf16[3,96,128], index: 1, kind: input, shape index: {}]
  %s2 = inlined_call_operand.vmem [shape: f32[1,128], index: 2, kind: input, shape index: {}]
  %s3 = inlined_call_operand.vmem [shape: bf16[128,128], index: 3, kind: input, shape index: {}]
  %s4 = inlined_call_operand.vmem [shape: f32[1,128], index: 4, kind: input, shape index: {}]
  %s5 = inlined_call_operand.vmem [shape: bf16[2,8,8,128], index: 5, kind: output, shape index: {}]
  %s6 = sld [smem:[#allocation0]]
  $region53: #{balle2_encoder_forward.5} parent=0
    _
  %s8 = ssub.s32 1, %s6
  %s9 = scalar_select 0, %s8, %s6
  loop: start=0, step=1, limit=4
  $region2: #{balle2_encoder_forward.5} parent=0 // loop_pre_header
    _
  $region3: #{balle2_encoder_forward.5} parent=0 // loop_header
    %s11 = sphi 0, %s15
    %p12 = scmp.ge.s32.totalorder %s11, 4
    %s18 = sphi 0, %s30
    %s19 = sphi 0, %s26
    %s20 = sphi 0, %s18
    %s21 = sphi 0, %s19
    %s22 = sphi 0, %s20
    %s23 = sphi 0, %s21
    %s33 = sphi 0, %s35
    %s36 = sphi 0, %s33
    %s37 = sphi 0, %s36
    %s53 = sphi 0, %s37
    %s57 = sphi 0, %s57
    %s59 = sphi 0, %s57
    %s60 = sphi 0, %s59
    %s74 = sphi 0, %s60
    %s78 = sphi 0, %s78
    %s80 = sphi 0, %s78
    %s81 = sphi 0, %s80
    %s95 = sphi 0, %s81
    %s99 = sphi 0, %s99
    %s101 = sphi 0, %s99
    %s102 = sphi 0, %s101
    %s116 = sphi 0, %s102
    %s120 = sphi 0, %s120
    %s122 = sphi 0, %s120
    %s123 = sphi 0, %s122
    %s137 = sphi 0, %s123
    %s145 = sphi 0, %s147
    %s148 = sphi 0, %s145
    %s149 = sphi 0, %s148
    %s165 = sphi 0, %s149
  $region4: #{balle2_encoder_forward.5} parent=0 // loop_header_branch
    %14 = sbr.rel (%p12) target = $region8
  $region5: #{balle2_encoder_forward.5} parent=0 // loop_body
    %s16 = ssub.s32 %s11, 1
    %s17 = ssub.s32 %s11, 2
    %s24 = sadd.s32 1, %s19
    %p25 = scmp.ge.s32.totalorder %s24, 1
    %s26 = scalar_select %p25, 0, %s24
    %s27 = sadd.s32 1, %s18
    %s28 = scalar_select %p25, %s27, %s18
    %p29 = scmp.ge.s32.totalorder %s28, 2
    %s30 = scalar_select %p29, 0, %s28
    %s31 = ssub.s32 %s18, %s30
    %p32 = scmp.eq.s32.totalorder %s31, 0
    %s34 = sadd.s32 %s33, 1
    %s35 = scalar_select %p32, %s33, %s34
    %p38 = pneg %p32
    %p39 = scmp.eq.s32.totalorder %s11, 1
    %p40 = por %p38, %p39
    %p41 = scmp.ne.s32.totalorder %s33, %s36
    %p42 = scmp.eq.s32.totalorder %s11, 0
    %p43 = por %p41, %p42
    %p44 = scmp.ne.s32.totalorder %s33, %s36
    %p45 = scmp.eq.s32.totalorder %s16, 1
    %p46 = por %p44, %p45
    %p47 = scmp.ne.s32.totalorder %s36, %s37
    %p48 = scmp.eq.s32.totalorder %s16, 0
    %p49 = por %p47, %p48
    %p50 = scmp.ne.s32.totalorder %s36, %s37
    %p51 = scmp.eq.s32.totalorder %s17, 1
    %p52 = por %p50, %p51
    %p54 = scmp.ne.s32.totalorder %s37, %s53
    %p55 = scmp.eq.s32.totalorder %s17, 0
    %p56 = por %p54, %p55
    %s58 = sadd.s32 %s57, 1
    %p61 = scmp.eq.s32.totalorder %s11, 1
    %p62 = scmp.ne.s32.totalorder %s57, %s59
    %p63 = scmp.eq.s32.totalorder %s11, 0
    %p64 = por %p62, %p63
    %p65 = scmp.ne.s32.totalorder %s57, %s59
    %p66 = scmp.eq.s32.totalorder %s16, 1
    %p67 = por %p65, %p66
    %p68 = scmp.ne.s32.totalorder %s59, %s60
    %p69 = scmp.eq.s32.totalorder %s16, 0
    %p70 = por %p68, %p69
    %p71 = scmp.ne.s32.totalorder %s59, %s60
    %p72 = scmp.eq.s32.totalorder %s17, 1
    %p73 = por %p71, %p72
    %p75 = scmp.ne.s32.totalorder %s60, %s74
    %p76 = scmp.eq.s32.totalorder %s17, 0
    %p77 = por %p75, %p76
    %s79 = sadd.s32 %s78, 1
    %p82 = scmp.eq.s32.totalorder %s11, 1
    %p83 = scmp.ne.s32.totalorder %s78, %s80
    %p84 = scmp.eq.s32.totalorder %s11, 0
    %p85 = por %p83, %p84
    %p86 = scmp.ne.s32.totalorder %s78, %s80
    %p87 = scmp.eq.s32.totalorder %s16, 1
    %p88 = por %p86, %p87
    %p89 = scmp.ne.s32.totalorder %s80, %s81
    %p90 = scmp.eq.s32.totalorder %s16, 0
    %p91 = por %p89, %p90
    %p92 = scmp.ne.s32.totalorder %s80, %s81
    %p93 = scmp.eq.s32.totalorder %s17, 1
    %p94 = por %p92, %p93
    %p96 = scmp.ne.s32.totalorder %s81, %s95
    %p97 = scmp.eq.s32.totalorder %s17, 0
    %p98 = por %p96, %p97
    %s100 = sadd.s32 %s99, 1
    %p103 = scmp.eq.s32.totalorder %s11, 1
    %p104 = scmp.ne.s32.totalorder %s99, %s101
    %p105 = scmp.eq.s32.totalorder %s11, 0
    %p106 = por %p104, %p105
    %p107 = scmp.ne.s32.totalorder %s99, %s101
    %p108 = scmp.eq.s32.totalorder %s16, 1
    %p109 = por %p107, %p108
    %p110 = scmp.ne.s32.totalorder %s101, %s102
    %p111 = scmp.eq.s32.totalorder %s16, 0
    %p112 = por %p110, %p111
    %p113 = scmp.ne.s32.totalorder %s101, %s102
    %p114 = scmp.eq.s32.totalorder %s17, 1
    %p115 = por %p113, %p114
    %p117 = scmp.ne.s32.totalorder %s102, %s116
    %p118 = scmp.eq.s32.totalorder %s17, 0
    %p119 = por %p117, %p118
    %s121 = sadd.s32 %s120, 1
    %p124 = scmp.eq.s32.totalorder %s11, 1
    %p125 = scmp.ne.s32.totalorder %s120, %s122
    %p126 = scmp.eq.s32.totalorder %s11, 0
    %p127 = por %p125, %p126
    %p128 = scmp.ne.s32.totalorder %s120, %s122
    %p129 = scmp.eq.s32.totalorder %s16, 1
    %p130 = por %p128, %p129
    %p131 = scmp.ne.s32.totalorder %s122, %s123
    %p132 = scmp.eq.s32.totalorder %s16, 0
    %p133 = por %p131, %p132
    %p134 = scmp.ne.s32.totalorder %s122, %s123
    %p135 = scmp.eq.s32.totalorder %s17, 1
    %p136 = por %p134, %p135
    %p138 = scmp.ne.s32.totalorder %s123, %s137
    %p139 = scmp.eq.s32.totalorder %s17, 0
    %p140 = por %p138, %p139
    %s141 = ssub.s32 %s18, %s30
    %s142 = ssub.s32 %s19, %s26
    %s143 = sor.u32 %s141, %s142
    %p144 = scmp.eq.s32.totalorder %s143, 0
    %s146 = sadd.s32 %s145, 1
    %s147 = scalar_select %p144, %s145, %s146
    %p150 = pneg %p144
    %p151 = scmp.eq.s32.totalorder %s11, 1
    %p152 = por %p150, %p151
    %p153 = scmp.ne.s32.totalorder %s145, %s148
    %p154 = scmp.eq.s32.totalorder %s11, 0
    %p155 = por %p153, %p154
    %p156 = scmp.ne.s32.totalorder %s145, %s148
    %p157 = scmp.eq.s32.totalorder %s16, 1
    %p158 = por %p156, %p157
    %p159 = scmp.ne.s32.totalorder %s148, %s149
    %p160 = scmp.eq.s32.totalorder %s16, 0
    %p161 = por %p159, %p160
    %p162 = scmp.ne.s32.totalorder %s148, %s149
    %p163 = scmp.eq.s32.totalorder %s17, 1
    %p164 = por %p162, %p163
    %p166 = scmp.ne.s32.totalorder %s149, %s165
    %p167 = scmp.eq.s32.totalorder %s17, 0
    %p168 = por %p166, %p167
    %p169 = scmp.le.s32.totalorder 1, %s11
    %p170 = scmp.lt.s32.totalorder %s11, 3
    %p171 = pnand %p169, %p170
    %p172 = pneg %p171
    // Predicated region
    $region9: #{balle2_encoder_forward.5} parent=5 // pred_check
      _
    $region10: #{balle2_encoder_forward.5} parent=5 // pred_check_branch
      %174 = sbr.rel (%p171) target = $region12
    $region11: #{balle2_encoder_forward.5} parent=5 // pred_region
      %s175 = ssub.s32 %s11, 1
      // Predicated region
      $region13: #{balle2_encoder_forward.5} parent=11 // pred_check
        %p176 = pneg %p70
      $region14: #{balle2_encoder_forward.5} parent=11 // pred_check_branch
        %178 = sbr.rel (%p176) target = $region16
      $region15: #{balle2_encoder_forward.5} parent=11 // pred_region
        _
      $region16: #{balle2_encoder_forward.5} parent=11 // pred_fallthru
        _
      // Predicated region
      $region17: #{balle2_encoder_forward.5} parent=11 // pred_check
        %p179 = pneg %p91
      $region18: #{balle2_encoder_forward.5} parent=11 // pred_check_branch
        %181 = sbr.rel (%p179) target = $region20
      $region19: #{balle2_encoder_forward.5} parent=11 // pred_region
        _
      $region20: #{balle2_encoder_forward.5} parent=11 // pred_fallthru
        _
      // Predicated region
      $region21: #{balle2_encoder_forward.5} parent=11 // pred_check
        %p182 = pneg %p112
      $region22: #{balle2_encoder_forward.5} parent=11 // pred_check_branch
        %184 = sbr.rel (%p182) target = $region24
      $region23: #{balle2_encoder_forward.5} parent=11 // pred_region
        _
      $region24: #{balle2_encoder_forward.5} parent=11 // pred_fallthru
        _
      // Predicated region
      $region25: #{balle2_encoder_forward.5} parent=11 // pred_check
        %p185 = pneg %p133
      $region26: #{balle2_encoder_forward.5} parent=11 // pred_check_branch
        %187 = sbr.rel (%p185) target = $region28
      $region27: #{balle2_encoder_forward.5} parent=11 // pred_region
        _
      $region28: #{balle2_encoder_forward.5} parent=11 // pred_fallthru
        _
    $region12: #{balle2_encoder_forward.5} parent=5 // pred_fallthru
      _
    %p188 = scmp.lt.s32.totalorder %s11, 2
    // Predicated region
    $region29: #{balle2_encoder_forward.5} parent=5 // pred_check
      %p189 = pneg %p188
    $region30: #{balle2_encoder_forward.5} parent=5 // pred_check_branch
      %191 = sbr.rel (%p189) target = $region32
    $region31: #{balle2_encoder_forward.5} parent=5 // pred_region
      // Predicated region
      $region33: #{balle2_encoder_forward.5} parent=31 // pred_check
        %p192 = pneg %p43
      $region34: #{balle2_encoder_forward.5} parent=31 // pred_check_branch
        %194 = sbr.rel (%p192) target = $region36
      $region35: #{balle2_encoder_forward.5} parent=31 // pred_region
        %p195 = scmp.lt.s32.totalorder %s18, 1
        %s196 = scalar_select %p195, %s18, 1
        %s197 = smul.addr %s196, 10
        %s198 = smul.addr %s197, 4
        %s199 = scalar_lea.vmem %s0, %s198
      $region36: #{balle2_encoder_forward.5} parent=31 // pred_fallthru
        _
    $region32: #{balle2_encoder_forward.5} parent=5 // pred_fallthru
      _
    %p200 = scmp.le.s32.totalorder 1, %s11
    %p201 = scmp.lt.s32.totalorder %s11, 3
    %p202 = pnand %p200, %p201
    %p203 = pneg %p202
    // Predicated region
    $region37: #{balle2_encoder_forward.5} parent=5 // pred_check
      _
    $region38: #{balle2_encoder_forward.5} parent=5 // pred_check_branch
      %205 = sbr.rel (%p202) target = $region40
    $region39: #{balle2_encoder_forward.5} parent=5 // pred_region
      %s206 = ssub.s32 %s11, 1
      %p207 = scmp.lt.s32.totalorder %s20, 1
      %s208 = scalar_select %p207, %s20, 1
      %s209 = smul.addr %s208, 10
      %s210 = smul.addr %s209, 4
      %s211 = scalar_lea.vmem %s0, %s210
      %p212 = pneg %p49
      %p213 = pneg %p46
      %p214 = pneg %p70
      %p215 = pneg %p67
      %p216 = pneg %p91
      %p217 = pneg %p88
      %p218 = pneg %p112
      %p219 = pneg %p109
      %p220 = pneg %p133
      %p221 = pneg %p130
      %p222 = pneg %p161
      %p223 = pneg %p158
      %s224 = smul.u32 8, %s21
      %p225 = scmp.lt.s32.totalorder %s20, 1
      %s226 = scalar_select %p225, %s20, 1
      %p227 = scmp.lt.s32.totalorder %s224, 7
      %s228 = scalar_select %p227, %s224, 7
      %s229 = smul.addr %s226, 8
      %s230 = sadd.s32 %s228, %s229
      %s231 = smul.addr %s230, 4
      %s232 = scalar_lea.vmem %s5, %s231
      %p233 = scmp.lt.s32.totalorder %s20, 1
      %s234 = scalar_select %p233, %s20, 1
      %s235 = smul.addr %s234, 10
      %s236 = smul.addr %s235, 4
      %s237 = scalar_lea.vmem %s0, %s236
      %s238 = smul.u32 8, %s21
      %p239 = scmp.lt.s32.totalorder %s20, 1
      %s240 = scalar_select %p239, %s20, 1
      %p241 = scmp.lt.s32.totalorder %s238, 7
      %s242 = scalar_select %p241, %s238, 7
      %s243 = smul.addr %s240, 8
      %s244 = sadd.s32 %s242, %s243
      %s245 = smul.addr %s244, 4
      %s246 = scalar_lea.vmem %s5, %s245
      %s247 = smul.u32 8, %s21
      %s249 = smul.u32 %s21, 8
      %s250 = smul.addr %s249, 4
      %s251 = scalar_lea.vmem %s237, %s250
      %v252 = vld [vmem:[%s251] sm:$0xf]
      %v253 = vld [vmem:[%s251 + $0x4] sm:$0xf]
      %v254 = vld [vmem:[%s251 + $0x8] sm:$0xf]
      %v255 = vld [vmem:[%s251 + $0xc] sm:$0xf]
      %v256 = vld [vmem:[%s251 + $0x10] sm:$0xf]
      %v257 = vld [vmem:[%s251 + $0x14] sm:$0xf]
      %v258 = vld [vmem:[%s251 + $0x18] sm:$0xf]
      %v259 = vld [vmem:[%s251 + $0x1c] sm:$0xf]
      %v260 = vld [vmem:[%s1] sm:$0xf]
      %v261 = vld [vmem:[%s1 + $0x4] sm:$0xf]
      %v262 = vld [vmem:[%s1 + $0x8] sm:$0xf]
      %v263 = vld [vmem:[%s1 + $0xc] sm:$0xf]
      %v264 = vld [vmem:[%s1 + $0x10] sm:$0xf]
      %v265 = vld [vmem:[%s1 + $0x14] sm:$0xf]
      %v266 = vld [vmem:[%s1 + $0x18] sm:$0xf]
      %v267 = vld [vmem:[%s1 + $0x1c] sm:$0xf]
      %v268 = vld [vmem:[%s1 + $0x20] sm:$0xf]
      %v269 = vld [vmem:[%s1 + $0x24] sm:$0xf]
      %v270 = vld [vmem:[%s1 + $0x28] sm:$0xf]
      %v271 = vld [vmem:[%s1 + $0x2c] sm:$0xf]
      %s272 = sadd.s32 %s249, 1
      %s273 = smul.addr %s272, 4
      %s274 = scalar_lea.vmem %s237, %s273
      %v275 = vld [vmem:[%s274] sm:$0xf]
      %v276 = vld [vmem:[%s274 + $0x4] sm:$0xf]
      %v277 = vld [vmem:[%s274 + $0x8] sm:$0xf]
      %v278 = vld [vmem:[%s274 + $0xc] sm:$0xf]
      %v279 = vld [vmem:[%s274 + $0x10] sm:$0xf]
      %v280 = vld [vmem:[%s274 + $0x14] sm:$0xf]
      %v281 = vld [vmem:[%s274 + $0x18] sm:$0xf]
      %v282 = vld [vmem:[%s274 + $0x1c] sm:$0xf]
      %s283 = scalar_lea.vmem %s1, 48
      %v284 = vld [vmem:[%s283] sm:$0xf]
      %v285 = vld [vmem:[%s283 + $0x4] sm:$0xf]
      %v286 = vld [vmem:[%s283 + $0x8] sm:$0xf]
      %v287 = vld [vmem:[%s283 + $0xc] sm:$0xf]
      %v288 = vld [vmem:[%s283 + $0x10] sm:$0xf]
      %v289 = vld [vmem:[%s283 + $0x14] sm:$0xf]
      %v290 = vld [vmem:[%s283 + $0x18] sm:$0xf]
      %v291 = vld [vmem:[%s283 + $0x1c] sm:$0xf]
      %v292 = vld [vmem:[%s283 + $0x20] sm:$0xf]
      %v293 = vld [vmem:[%s283 + $0x24] sm:$0xf]
      %v294 = vld [vmem:[%s283 + $0x28] sm:$0xf]
      %v295 = vld [vmem:[%s283 + $0x2c] sm:$0xf]
      %v304 = vunpack.c.l.b16 %v275
      %v305 = vunpack.c.l.b16 %v276
      %v306 = vunpack.c.l.b16 %v277
      %v307 = vunpack.c.l.b16 %v278
      %v308 = vunpack.c.l.b16 %v279
      %v309 = vunpack.c.l.b16 %v280
      %v310 = vunpack.c.l.b16 %v281
      %v311 = vunpack.c.l.b16 %v282
      %v312 = vpack.c.b16 %v305, %v304
      %v313 = vpack.c.b16 %v307, %v306
      %v314 = vpack.c.b16 %v309, %v308
      %v315 = vpack.c.b16 %v311, %v310
      %v328 = vunpack.c.l.b16 %v284
      %v329 = vunpack.c.l.b16 %v285
      %v330 = vunpack.c.l.b16 %v286
      %v331 = vunpack.c.l.b16 %v287
      %v332 = vunpack.c.l.b16 %v288
      %v333 = vunpack.c.l.b16 %v289
      %v334 = vunpack.c.l.b16 %v290
      %v335 = vunpack.c.l.b16 %v291
      %v336 = vunpack.c.l.b16 %v292
      %v337 = vunpack.c.l.b16 %v293
      %v338 = vunpack.c.l.b16 %v294
      %v339 = vunpack.c.l.b16 %v295
      %v340 = vpack.c.b16 %v329, %v328
      %v341 = vpack.c.b16 %v331, %v330
      %v342 = vpack.c.b16 %v333, %v332
      %v343 = vpack.c.b16 %v335, %v334
      %v344 = vpack.c.b16 %v337, %v336
      %v345 = vpack.c.b16 %v339, %v338
      %vm352 = vcmask 785408
      %v354 = vsel %vm352, %v312, 0
      %v357 = vsel %vm352, %v313, 0
      %v360 = vsel %vm352, %v314, 0
      %v363 = vsel %vm352, %v315, 0
      %365 = vmatprep.subr.bf16.mxu0 0
      %366 = vmatpush1.bf16.msra.mxu0 0
      %367 = vmatprep.subr.bf16.mxu0 0
      %368 = vmatpush1.bf16.msra.mxu0 0
      %369 = vmatprep.subr.bf16.mxu0 0
      %370 = vmatpush1.bf16.msra.mxu0 %v345
      %371 = vmatprep.subr.bf16.mxu0 0
      %372 = vmatpush1.bf16.msra.mxu0 %v344
      %373 = vmatprep.subr.bf16.mxu0 0
      %374 = vmatpush1.bf16.msra.mxu0 %v343
      %375 = vmatprep.subr.bf16.mxu0 0
      %376 = vmatpush1.bf16.msra.mxu0 %v342
      %377 = vmatprep.subr.bf16.mxu0 0
      %378 = vmatpush1.bf16.msra.mxu0 %v341
      %379 = vmatprep.subr.bf16.mxu0 0
      %380 = vmatpush1.bf16.msra.mxu0 %v340
      %381 = vmatprep.subr.bf16.mxu0 0
      %382 = vmatpush2.bf16.msra.mxu0 0
      %383 = vmatprep.subr.bf16.mxu0 0
      %384 = vmatpush2.bf16.msra.mxu0 0
      %385 = vmatprep.subr.bf16.mxu0 0
      %386 = vmatpush2.bf16.msra.mxu0 0
      %387 = vmatprep.subr.bf16.mxu0 0
      %388 = vmatpush2.bf16.msra.mxu0 0
      %389 = vmatprep.subr.bf16.mxu0 0
      %390 = vmatpush2.bf16.msra.mxu0 0
      %391 = vmatprep.subr.bf16.mxu0 0
      %392 = vmatpush2.bf16.msra.mxu0 0
      %393 = vmatprep.subr.bf16.mxu0 0
      %394 = vmatpush2.bf16.msra.mxu0 0
      %395 = vmatprep.subr.bf16.mxu0 0
      %396 = vmatpush2.bf16.msra.mxu0 0
      %397 = vmatprep.mubr.bf16.mxu0 0
      %398 = vmatmul.mubr.bf16.gmra.mxu0 %v354
      %v399 = vpop.f32.mrf.mxu0
      %v400 = vadd.f32 0.0, %v399
      %v401 = vpop.f32.mrf.mxu0
      %v402 = vpop.f32.mrf.mxu0
      %v403 = vadd.f32 0.0, %v402
      %v404 = vpop.f32.mrf.mxu0
      %405 = vmatprep.mubr.bf16.mxu0 0
      %406 = vmatmul.mubr.bf16.gmra.mxu0 %v357
      %v407 = vpop.f32.mrf.mxu0
      %v408 = vadd.f32 0.0, %v407
      %v409 = vpop.f32.mrf.mxu0
      %v410 = vpop.f32.mrf.mxu0
      %v411 = vadd.f32 0.0, %v410
      %v412 = vpop.f32.mrf.mxu0
      %413 = vmatprep.mubr.bf16.mxu0 0
      %414 = vmatmul.mubr.bf16.gmra.mxu0 %v360
      %v415 = vpop.f32.mrf.mxu0
      %v416 = vadd.f32 0.0, %v415
      %v417 = vpop.f32.mrf.mxu0
      %v418 = vpop.f32.mrf.mxu0
      %v419 = vadd.f32 0.0, %v418
      %v420 = vpop.f32.mrf.mxu0
      %421 = vmatprep.mubr.bf16.mxu0 0
      %422 = vmatmul.mubr.bf16.gmra.mxu0 %v363
      %v423 = vpop.f32.mrf.mxu0
      %v424 = vadd.f32 0.0, %v423
      %v425 = vpop.f32.mrf.mxu0
      %v426 = vpop.f32.mrf.mxu0
      %v427 = vadd.f32 0.0, %v426
      %v428 = vpop.f32.mrf.mxu0
      %429 = vdwg.mxu0
      %v438 = vunpack.c.l.b16 %v252
      %v439 = vunpack.c.l.b16 %v253
      %v440 = vunpack.c.l.b16 %v254
      %v441 = vunpack.c.l.b16 %v255
      %v442 = vunpack.c.l.b16 %v256
      %v443 = vunpack.c.l.b16 %v257
      %v444 = vunpack.c.l.b16 %v258
      %v445 = vunpack.c.l.b16 %v259
      %v446 = vpack.c.b16 %v439, %v438
      %v447 = vpack.c.b16 %v441, %v440
      %v448 = vpack.c.b16 %v443, %v442
      %v449 = vpack.c.b16 %v445, %v444
      %v462 = vunpack.c.l.b16 %v260
      %v463 = vunpack.c.l.b16 %v261
      %v464 = vunpack.c.l.b16 %v262
      %v465 = vunpack.c.l.b16 %v263
      %v466 = vunpack.c.l.b16 %v264
      %v467 = vunpack.c.l.b16 %v265
      %v468 = vunpack.c.l.b16 %v266
      %v469 = vunpack.c.l.b16 %v267
      %v470 = vunpack.c.l.b16 %v268
      %v471 = vunpack.c.l.b16 %v269
      %v472 = vunpack.c.l.b16 %v270
      %v473 = vunpack.c.l.b16 %v271
      %v474 = vpack.c.b16 %v463, %v462
      %v475 = vpack.c.b16 %v465, %v464
      %v476 = vpack.c.b16 %v467, %v466
      %v477 = vpack.c.b16 %v469, %v468
      %v478 = vpack.c.b16 %v471, %v470
      %v479 = vpack.c.b16 %v473, %v472
      %v487 = vsel %vm352, %v446, 0
      %v490 = vsel %vm352, %v447, 0
      %v493 = vsel %vm352, %v448, 0
      %v496 = vsel %vm352, %v449, 0
      %498 = vmatprep.subr.bf16.mxu0 0
      %499 = vmatpush1.bf16.msra.mxu0 0
      %500 = vmatprep.subr.bf16.mxu0 0
      %501 = vmatpush1.bf16.msra.mxu0 0
      %502 = vmatprep.subr.bf16.mxu0 0
      %503 = vmatpush1.bf16.msra.mxu0 %v479
      %504 = vmatprep.subr.bf16.mxu0 0
      %505 = vmatpush1.bf16.msra.mxu0 %v478
      %506 = vmatprep.subr.bf16.mxu0 0
      %507 = vmatpush1.bf16.msra.mxu0 %v477
      %508 = vmatprep.subr.bf16.mxu0 0
      %509 = vmatpush1.bf16.msra.mxu0 %v476
      %510 = vmatprep.subr.bf16.mxu0 0
      %511 = vmatpush1.bf16.msra.mxu0 %v475
      %512 = vmatprep.subr.bf16.mxu0 0
      %513 = vmatpush1.bf16.msra.mxu0 %v474
      %514 = vmatprep.subr.bf16.mxu0 0
      %515 = vmatpush2.bf16.msra.mxu0 0
      %516 = vmatprep.subr.bf16.mxu0 0
      %517 = vmatpush2.bf16.msra.mxu0 0
      %518 = vmatprep.subr.bf16.mxu0 0
      %519 = vmatpush2.bf16.msra.mxu0 0
      %520 = vmatprep.subr.bf16.mxu0 0
      %521 = vmatpush2.bf16.msra.mxu0 0
      %522 = vmatprep.subr.bf16.mxu0 0
      %523 = vmatpush2.bf16.msra.mxu0 0
      %524 = vmatprep.subr.bf16.mxu0 0
      %525 = vmatpush2.bf16.msra.mxu0 0
      %526 = vmatprep.subr.bf16.mxu0 0
      %527 = vmatpush2.bf16.msra.mxu0 0
      %528 = vmatprep.subr.bf16.mxu0 0
      %529 = vmatpush2.bf16.msra.mxu0 0
      %530 = vmatprep.mubr.bf16.mxu0 0
      %531 = vmatmul.mubr.bf16.gmra.mxu0 %v487
      %v532 = vpop.f32.mrf.mxu0
      %v533 = vadd.f32 %v400, %v532
      %v534 = vpop.f32.mrf.mxu0
      %v535 = vpop.f32.mrf.mxu0
      %v536 = vadd.f32 %v403, %v535
      %v537 = vpop.f32.mrf.mxu0
      %538 = vmatprep.mubr.bf16.mxu0 0
      %539 = vmatmul.mubr.bf16.gmra.mxu0 %v490
      %v540 = vpop.f32.mrf.mxu0
      %v541 = vadd.f32 %v408, %v540
      %v542 = vpop.f32.mrf.mxu0
      %v543 = vpop.f32.mrf.mxu0
      %v544 = vadd.f32 %v411, %v543
      %v545 = vpop.f32.mrf.mxu0
      %546 = vmatprep.mubr.bf16.mxu0 0
      %547 = vmatmul.mubr.bf16.gmra.mxu0 %v493
      %v548 = vpop.f32.mrf.mxu0
      %v549 = vadd.f32 %v416, %v548
      %v550 = vpop.f32.mrf.mxu0
      %v551 = vpop.f32.mrf.mxu0
      %v552 = vadd.f32 %v419, %v551
      %v553 = vpop.f32.mrf.mxu0
      %554 = vmatprep.mubr.bf16.mxu0 0
      %555 = vmatmul.mubr.bf16.gmra.mxu0 %v496
      %v556 = vpop.f32.mrf.mxu0
      %v557 = vadd.f32 %v424, %v556
      %v558 = vpop.f32.mrf.mxu0
      %v559 = vpop.f32.mrf.mxu0
      %v560 = vadd.f32 %v427, %v559
      %v561 = vpop.f32.mrf.mxu0
      %562 = vdwg.mxu0
      %s563 = sadd.s32 %s249, 2
      %s564 = smul.addr %s563, 4
      %s565 = scalar_lea.vmem %s237, %s564
      %v566 = vld [vmem:[%s565] sm:$0xf]
      %v567 = vld [vmem:[%s565 + $0x4] sm:$0xf]
      %v568 = vld [vmem:[%s565 + $0x8] sm:$0xf]
      %v569 = vld [vmem:[%s565 + $0xc] sm:$0xf]
      %v570 = vld [vmem:[%s565 + $0x10] sm:$0xf]
      %v571 = vld [vmem:[%s565 + $0x14] sm:$0xf]
      %v572 = vld [vmem:[%s565 + $0x18] sm:$0xf]
      %v573 = vld [vmem:[%s565 + $0x1c] sm:$0xf]
      %s574 = scalar_lea.vmem %s1, 96
      %v575 = vld [vmem:[%s574] sm:$0xf]
      %v576 = vld [vmem:[%s574 + $0x4] sm:$0xf]
      %v577 = vld [vmem:[%s574 + $0x8] sm:$0xf]
      %v578 = vld [vmem:[%s574 + $0xc] sm:$0xf]
      %v579 = vld [vmem:[%s574 + $0x10] sm:$0xf]
      %v580 = vld [vmem:[%s574 + $0x14] sm:$0xf]
      %v581 = vld [vmem:[%s574 + $0x18] sm:$0xf]
      %v582 = vld [vmem:[%s574 + $0x1c] sm:$0xf]
      %v583 = vld [vmem:[%s574 + $0x20] sm:$0xf]
      %v584 = vld [vmem:[%s574 + $0x24] sm:$0xf]
      %v585 = vld [vmem:[%s574 + $0x28] sm:$0xf]
      %v586 = vld [vmem:[%s574 + $0x2c] sm:$0xf]
      %v595 = vunpack.c.l.b16 %v566
      %v596 = vunpack.c.l.b16 %v567
      %v597 = vunpack.c.l.b16 %v568
      %v598 = vunpack.c.l.b16 %v569
      %v599 = vunpack.c.l.b16 %v570
      %v600 = vunpack.c.l.b16 %v571
      %v601 = vunpack.c.l.b16 %v572
      %v602 = vunpack.c.l.b16 %v573
      %v603 = vpack.c.b16 %v596, %v595
      %v604 = vpack.c.b16 %v598, %v597
      %v605 = vpack.c.b16 %v600, %v599
      %v606 = vpack.c.b16 %v602, %v601
      %v619 = vunpack.c.l.b16 %v575
      %v620 = vunpack.c.l.b16 %v576
      %v621 = vunpack.c.l.b16 %v577
      %v622 = vunpack.c.l.b16 %v578
      %v623 = vunpack.c.l.b16 %v579
      %v624 = vunpack.c.l.b16 %v580
      %v625 = vunpack.c.l.b16 %v581
      %v626 = vunpack.c.l.b16 %v582
      %v627 = vunpack.c.l.b16 %v583
      %v628 = vunpack.c.l.b16 %v584
      %v629 = vunpack.c.l.b16 %v585
      %v630 = vunpack.c.l.b16 %v586
      %v631 = vpack.c.b16 %v620, %v619
      %v632 = vpack.c.b16 %v622, %v621
      %v633 = vpack.c.b16 %v624, %v623
      %v634 = vpack.c.b16 %v626, %v625
      %v635 = vpack.c.b16 %v628, %v627
      %v636 = vpack.c.b16 %v630, %v629
      %v644 = vsel %vm352, %v603, 0
      %v647 = vsel %vm352, %v604, 0
      %v650 = vsel %vm352, %v605, 0
      %v653 = vsel %vm352, %v606, 0
      %655 = vmatprep.subr.bf16.mxu0 0
      %656 = vmatpush1.bf16.msra.mxu0 0
      %657 = vmatprep.subr.bf16.mxu0 0
      %658 = vmatpush1.bf16.msra.mxu0 0
      %659 = vmatprep.subr.bf16.mxu0 0
      %660 = vmatpush1.bf16.msra.mxu0 %v636
      %661 = vmatprep.subr.bf16.mxu0 0
      %662 = vmatpush1.bf16.msra.mxu0 %v635
      %663 = vmatprep.subr.bf16.mxu0 0
      %664 = vmatpush1.bf16.msra.mxu0 %v634
      %665 = vmatprep.subr.bf16.mxu0 0
      %666 = vmatpush1.bf16.msra.mxu0 %v633
      %667 = vmatprep.subr.bf16.mxu0 0
      %668 = vmatpush1.bf16.msra.mxu0 %v632
      %669 = vmatprep.subr.bf16.mxu0 0
      %670 = vmatpush1.bf16.msra.mxu0 %v631
      %671 = vmatprep.subr.bf16.mxu0 0
      %672 = vmatpush2.bf16.msra.mxu0 0
      %673 = vmatprep.subr.bf16.mxu0 0
      %674 = vmatpush2.bf16.msra.mxu0 0
      %675 = vmatprep.subr.bf16.mxu0 0
      %676 = vmatpush2.bf16.msra.mxu0 0
      %677 = vmatprep.subr.bf16.mxu0 0
      %678 = vmatpush2.bf16.msra.mxu0 0
      %679 = vmatprep.subr.bf16.mxu0 0
      %680 = vmatpush2.bf16.msra.mxu0 0
      %681 = vmatprep.subr.bf16.mxu0 0
      %682 = vmatpush2.bf16.msra.mxu0 0
      %683 = vmatprep.subr.bf16.mxu0 0
      %684 = vmatpush2.bf16.msra.mxu0 0
      %685 = vmatprep.subr.bf16.mxu0 0
      %686 = vmatpush2.bf16.msra.mxu0 0
      %687 = vmatprep.mubr.bf16.mxu0 0
      %688 = vmatmul.mubr.bf16.gmra.mxu0 %v644
      %v689 = vpop.f32.mrf.mxu0
      %v690 = vadd.f32 0.0, %v689
      %v691 = vpop.f32.mrf.mxu0
      %v692 = vpop.f32.mrf.mxu0
      %v693 = vadd.f32 0.0, %v692
      %v694 = vpop.f32.mrf.mxu0
      %695 = vmatprep.mubr.bf16.mxu0 0
      %696 = vmatmul.mubr.bf16.gmra.mxu0 %v647
      %v697 = vpop.f32.mrf.mxu0
      %v698 = vadd.f32 0.0, %v697
      %v699 = vpop.f32.mrf.mxu0
      %v700 = vpop.f32.mrf.mxu0
      %v701 = vadd.f32 0.0, %v700
      %v702 = vpop.f32.mrf.mxu0
      %703 = vmatprep.mubr.bf16.mxu0 0
      %704 = vmatmul.mubr.bf16.gmra.mxu0 %v650
      %v705 = vpop.f32.mrf.mxu0
      %v706 = vadd.f32 0.0, %v705
      %v707 = vpop.f32.mrf.mxu0
      %v708 = vpop.f32.mrf.mxu0
      %v709 = vadd.f32 0.0, %v708
      %v710 = vpop.f32.mrf.mxu0
      %711 = vmatprep.mubr.bf16.mxu0 0
      %712 = vmatmul.mubr.bf16.gmra.mxu0 %v653
      %v713 = vpop.f32.mrf.mxu0
      %v714 = vadd.f32 0.0, %v713
      %v715 = vpop.f32.mrf.mxu0
      %v716 = vpop.f32.mrf.mxu0
      %v717 = vadd.f32 0.0, %v716
      %v718 = vpop.f32.mrf.mxu0
      %719 = vdwg.mxu0
      %v720 = vadd.f32 %v533, %v690
      %v721 = vadd.f32 %v536, %v693
      %v722 = vadd.f32 %v541, %v698
      %v723 = vadd.f32 %v544, %v701
      %v724 = vadd.f32 %v549, %v706
      %v725 = vadd.f32 %v552, %v709
      %v726 = vadd.f32 %v557, %v714
      %v727 = vadd.f32 %v560, %v717
      %v728 = vld [vmem:[%s2] sm:$0x1]
      %v730 = vlaneseq
      %v731 = vshrl.u32 %v730, 7
      %v732 = vsub.s32 0, %v731
      %v733 = vrot.slane %v728, %v732
      %v735 = vadd.f32 %v720, %v733
      %v736 = vadd.f32 %v721, %v733
      %v737 = vadd.f32 %v722, %v733
      %v738 = vadd.f32 %v723, %v733
      %v739 = vadd.f32 %v724, %v733
      %v740 = vadd.f32 %v725, %v733
      %v741 = vadd.f32 %v726, %v733
      %v742 = vadd.f32 %v727, %v733
      %v743 = vmul.f32 %v735, %v735
      %v744 = vmul.f32 %v736, %v736
      %v745 = vmul.f32 %v737, %v737
      %v746 = vmul.f32 %v738, %v738
      %v747 = vmul.f32 %v739, %v739
      %v748 = vmul.f32 %v740, %v740
      %v749 = vmul.f32 %v741, %v741
      %v750 = vmul.f32 %v742, %v742
      %v751 = vpack.c.bf16 %v744, %v743
      %v752 = vpack.c.bf16 %v746, %v745
      %v753 = vpack.c.bf16 %v748, %v747
      %v754 = vpack.c.bf16 %v750, %v749
      %v755 = vld [vmem:[%s3] sm:$0xf]
      %v756 = vld [vmem:[%s3 + $0x4] sm:$0xf]
      %v757 = vld [vmem:[%s3 + $0x8] sm:$0xf]
      %v758 = vld [vmem:[%s3 + $0xc] sm:$0xf]
      %v759 = vld [vmem:[%s3 + $0x10] sm:$0xf]
      %v760 = vld [vmem:[%s3 + $0x14] sm:$0xf]
      %v761 = vld [vmem:[%s3 + $0x18] sm:$0xf]
      %v762 = vld [vmem:[%s3 + $0x1c] sm:$0xf]
      %v763 = vld [vmem:[%s3 + $0x20] sm:$0xf]
      %v764 = vld [vmem:[%s3 + $0x24] sm:$0xf]
      %v765 = vld [vmem:[%s3 + $0x28] sm:$0xf]
      %v766 = vld [vmem:[%s3 + $0x2c] sm:$0xf]
      %v767 = vld [vmem:[%s3 + $0x30] sm:$0xf]
      %v768 = vld [vmem:[%s3 + $0x34] sm:$0xf]
      %v769 = vld [vmem:[%s3 + $0x38] sm:$0xf]
      %v770 = vld [vmem:[%s3 + $0x3c] sm:$0xf]
      %v771 = vld [vmem:[%s4] sm:$0x1]
      %v773 = vlaneseq
      %v774 = vshrl.u32 %v773, 7
      %v775 = vsub.s32 0, %v774
      %v776 = vrot.slane %v771, %v775
      %v794 = vunpack.c.l.b16 %v755
      %v795 = vunpack.c.l.b16 %v756
      %v796 = vunpack.c.l.b16 %v757
      %v797 = vunpack.c.l.b16 %v758
      %v798 = vunpack.c.l.b16 %v759
      %v799 = vunpack.c.l.b16 %v760
      %v800 = vunpack.c.l.b16 %v761
      %v801 = vunpack.c.l.b16 %v762
      %v802 = vunpack.c.l.b16 %v763
      %v803 = vunpack.c.l.b16 %v764
      %v804 = vunpack.c.l.b16 %v765
      %v805 = vunpack.c.l.b16 %v766
      %v806 = vunpack.c.l.b16 %v767
      %v807 = vunpack.c.l.b16 %v768
      %v808 = vunpack.c.l.b16 %v769
      %v809 = vunpack.c.l.b16 %v770
      %v810 = vpack.c.b16 %v795, %v794
      %v811 = vpack.c.b16 %v797, %v796
      %v812 = vpack.c.b16 %v799, %v798
      %v813 = vpack.c.b16 %v801, %v800
      %v814 = vpack.c.b16 %v803, %v802
      %v815 = vpack.c.b16 %v805, %v804
      %v816 = vpack.c.b16 %v807, %v806
      %v817 = vpack.c.b16 %v809, %v808
      %826 = vmatprep.subr.bf16.mxu0 0
      %827 = vmatpush1.bf16.msra.mxu0 %v817
      %828 = vmatprep.subr.bf16.mxu0 0
      %829 = vmatpush1.bf16.msra.mxu0 %v816
      %830 = vmatprep.subr.bf16.mxu0 0
      %831 = vmatpush1.bf16.msra.mxu0 %v815
      %832 = vmatprep.subr.bf16.mxu0 0
      %833 = vmatpush1.bf16.msra.mxu0 %v814
      %834 = vmatprep.subr.bf16.mxu0 0
      %835 = vmatpush1.bf16.msra.mxu0 %v813
      %836 = vmatprep.subr.bf16.mxu0 0
      %837 = vmatpush1.bf16.msra.mxu0 %v812
      %838 = vmatprep.subr.bf16.mxu0 0
      %839 = vmatpush1.bf16.msra.mxu0 %v811
      %840 = vmatprep.subr.bf16.mxu0 0
      %841 = vmatpush1.bf16.msra.mxu0 %v810
      %842 = vmatprep.subr.bf16.mxu0 0
      %843 = vmatpush2.bf16.msra.mxu0 0
      %844 = vmatprep.subr.bf16.mxu0 0
      %845 = vmatpush2.bf16.msra.mxu0 0
      %846 = vmatprep.subr.bf16.mxu0 0
      %847 = vmatpush2.bf16.msra.mxu0 0
      %848 = vmatprep.subr.bf16.mxu0 0
      %849 = vmatpush2.bf16.msra.mxu0 0
      %850 = vmatprep.subr.bf16.mxu0 0
      %851 = vmatpush2.bf16.msra.mxu0 0
      %852 = vmatprep.subr.bf16.mxu0 0
      %853 = vmatpush2.bf16.msra.mxu0 0
      %854 = vmatprep.subr.bf16.mxu0 0
      %855 = vmatpush2.bf16.msra.mxu0 0
      %856 = vmatprep.subr.bf16.mxu0 0
      %857 = vmatpush2.bf16.msra.mxu0 0
      %858 = vmatprep.mubr.bf16.mxu0 0
      %859 = vmatmul.mubr.bf16.gmra.mxu0 %v751
      %v860 = vpop.f32.mrf.mxu0
      %v861 = vadd.f32 %v776, %v860
      %v862 = vpop.f32.mrf.mxu0
      %v863 = vpop.f32.mrf.mxu0
      %v864 = vadd.f32 %v776, %v863
      %v865 = vpop.f32.mrf.mxu0
      %866 = vmatprep.mubr.bf16.mxu0 0
      %867 = vmatmul.mubr.bf16.gmra.mxu0 %v752
      %v868 = vpop.f32.mrf.mxu0
      %v869 = vadd.f32 %v776, %v868
      %v870 = vpop.f32.mrf.mxu0
      %v871 = vpop.f32.mrf.mxu0
      %v872 = vadd.f32 %v776, %v871
      %v873 = vpop.f32.mrf.mxu0
      %874 = vmatprep.mubr.bf16.mxu0 0
      %875 = vmatmul.mubr.bf16.gmra.mxu0 %v753
      %v876 = vpop.f32.mrf.mxu0
      %v877 = vadd.f32 %v776, %v876
      %v878 = vpop.f32.mrf.mxu0
      %v879 = vpop.f32.mrf.mxu0
      %v880 = vadd.f32 %v776, %v879
      %v881 = vpop.f32.mrf.mxu0
      %882 = vmatprep.mubr.bf16.mxu0 0
      %883 = vmatmul.mubr.bf16.gmra.mxu0 %v754
      %v884 = vpop.f32.mrf.mxu0
      %v885 = vadd.f32 %v776, %v884
      %v886 = vpop.f32.mrf.mxu0
      %v887 = vpop.f32.mrf.mxu0
      %v888 = vadd.f32 %v776, %v887
      %v889 = vpop.f32.mrf.mxu0
      %890 = vdwg.mxu0
      %v891 = vrsqrt.pop %v861
      %v892 = vrsqrt.pop %v864
      %v893 = vrsqrt.pop %v869
      %v894 = vrsqrt.pop %v872
      %v895 = vrsqrt.pop %v877
      %v896 = vrsqrt.pop %v880
      %v897 = vrsqrt.pop %v885
      %v898 = vrsqrt.pop %v888
      %v899 = vmul.f32 %v735, %v891
      %v900 = vmul.f32 %v736, %v892
      %v901 = vmul.f32 %v737, %v893
      %v902 = vmul.f32 %v738, %v894
      %v903 = vmul.f32 %v739, %v895
      %v904 = vmul.f32 %v740, %v896
      %v905 = vmul.f32 %v741, %v897
      %v906 = vmul.f32 %v742, %v898
      %v907 = vpack.c.bf16 %v900, %v899
      %v908 = vpack.c.bf16 %v902, %v901
      %v909 = vpack.c.bf16 %v904, %v903
      %v910 = vpack.c.bf16 %v906, %v905
      %v915 = vunpack.c.l.b16 %v907
      %v916 = vunpack.c.h.b16 %v907
      %v917 = vunpack.c.l.b16 %v908
      %v918 = vunpack.c.h.b16 %v908
      %v919 = vunpack.c.l.b16 %v909
      %v920 = vunpack.c.h.b16 %v909
      %v921 = vunpack.c.l.b16 %v910
      %v922 = vunpack.c.h.b16 %v910
      %v923 = vpack.c.b16 %v915, %v915
      %v924 = vpack.c.b16 %v916, %v916
      %v925 = vpack.c.b16 %v917, %v917
      %v926 = vpack.c.b16 %v918, %v918
      %v927 = vpack.c.b16 %v919, %v919
      %v928 = vpack.c.b16 %v920, %v920
      %v929 = vpack.c.b16 %v921, %v921
      %v930 = vpack.c.b16 %v922, %v922
      %939 = vst [vmem:[%s246] sm:$0xf] %v923
      %940 = vst [vmem:[%s246 + $0x4] sm:$0xf] %v924
      %941 = vst [vmem:[%s246 + $0x8] sm:$0xf] %v925
      %942 = vst [vmem:[%s246 + $0xc] sm:$0xf] %v926
      %943 = vst [vmem:[%s246 + $0x10] sm:$0xf] %v927
      %944 = vst [vmem:[%s246 + $0x14] sm:$0xf] %v928
      %945 = vst [vmem:[%s246 + $0x18] sm:$0xf] %v929
      %946 = vst [vmem:[%s246 + $0x1c] sm:$0xf] %v930
      %s947 = smul.u32 8, %s21
      %p948 = scmp.lt.s32.totalorder %s20, 1
      %s949 = scalar_select %p948, %s20, 1
      %p950 = scmp.lt.s32.totalorder %s947, 7
      %s951 = scalar_select %p950, %s947, 7
      %s952 = smul.addr %s949, 8
      %s953 = sadd.s32 %s951, %s952
      %s954 = smul.addr %s953, 4
      %s955 = scalar_lea.vmem %s5, %s954
      // Predicated region
      $region41: #{balle2_encoder_forward.5} parent=39 // pred_check
        %p956 = pneg %p158
      $region42: #{balle2_encoder_forward.5} parent=39 // pred_check_branch
        %958 = sbr.rel (%p956) target = $region44
      $region43: #{balle2_encoder_forward.5} parent=39 // pred_region
        %s959 = smul.u32 8, %s21
      $region44: #{balle2_encoder_forward.5} parent=39 // pred_fallthru
        _
    $region40: #{balle2_encoder_forward.5} parent=5 // pred_fallthru
      _
    %p960 = scmp.le.s32.totalorder 2, %s11
    // Predicated region
    $region45: #{balle2_encoder_forward.5} parent=5 // pred_check
      %p961 = pneg %p960
    $region46: #{balle2_encoder_forward.5} parent=5 // pred_check_branch
      %963 = sbr.rel (%p961) target = $region48
    $region47: #{balle2_encoder_forward.5} parent=5 // pred_region
      %s964 = ssub.s32 %s11, 2
      // Predicated region
      $region49: #{balle2_encoder_forward.5} parent=47 // pred_check
        %p965 = pneg %p164
      $region50: #{balle2_encoder_forward.5} parent=47 // pred_check_branch
        %967 = sbr.rel (%p965) target = $region52
      $region51: #{balle2_encoder_forward.5} parent=47 // pred_region
        %s968 = smul.u32 8, %s23
        %p969 = scmp.lt.s32.totalorder %s22, 1
        %s970 = scalar_select %p969, %s22, 1
        %p971 = scmp.lt.s32.totalorder %s968, 7
        %s972 = scalar_select %p971, %s968, 7
        %s973 = smul.addr %s970, 8
        %s974 = sadd.s32 %s972, %s973
        %s975 = smul.addr %s974, 4
        %s976 = scalar_lea.vmem %s5, %s975
      $region52: #{balle2_encoder_forward.5} parent=47 // pred_fallthru
        _
    $region48: #{balle2_encoder_forward.5} parent=5 // pred_fallthru
      _
  $region6: #{balle2_encoder_forward.5} parent=0 // loop_footer
    %s15 = sadd.s32 1, %s11
  $region7: #{balle2_encoder_forward.5} parent=0 // loop_footer_branch
    %10 = sbr.rel target = $region3
  $region8: #{balle2_encoder_forward.5} parent=0 // loop_exit
    _

</llo_original>
